<compile_context>
chip_gen: v5e
topology: v5e:2x2
jax: 0.10.0
libtpu: 0.0.40
codegen_flags: <defaults>
</compile_context>

<pallas_src>
import functools

import jax
import jax.numpy as jnp
from jax import lax
from jax.experimental import pallas as pl
from jax.experimental.pallas import tpu as pltpu

N_V = 200                 # number of graph nodes (GCN1 in_features = 200, H0 = eye(200))
F1, F2, F3 = 100, 50, 20  # layer output widths
TAG = 27                  # fixed row selection in the module
_LANE = 128               # lane width for a dense output store


def _gcn3_kernel(*refs, tag, has_h0):
    """Fused 3-layer GCN forward.

    refs = (a_ref, [h0_ref,] w1_ref, w2_ref, w3_ref, o_ref)

    a_ref holds the raw 0/1 adjacency (bf16 or f32). Degrees are row sums of
    A_tilde = A + I and are used on both sides of the normalization, exactly as
    in the reference module (no symmetry assumption).
    """
    if has_h0:
        a_ref, h0_ref, w1_ref, w2_ref, w3_ref, o_ref = refs
    else:
        a_ref, w1_ref, w2_ref, w3_ref, o_ref = refs
        h0_ref = None

    f32 = jnp.float32
    a = a_ref[...]                                     # [N, N], bf16 (0/1, exact) or f32
    mm_dtype = a.dtype

    # Degrees of A_tilde = A + I (row sums).  Accumulate in f32; never
    # materializes a scaled / f32 copy of the [N, N] adjacency.
    d = jnp.sum(a, axis=1, keepdims=True, dtype=f32) + 1.0   # [N, 1]
    s = lax.rsqrt(d)                                         # d^{-1/2}, [N, 1] f32

    def mm(x, w):                                      # MXU matmul, f32 accumulation
        return jnp.dot(x.astype(mm_dtype), w.astype(mm_dtype),
                       preferred_element_type=f32)

    def propagate(hw):
        # A_hat @ hw == s * ( A @ (s*hw) + (s*hw) )   (self-loop folded, raw A used)
        y = s * hw                                     # f32 [N, F]
        return s * (mm(a, y) + y)

    # ---- layer 1 (right-associated: A_hat @ (H0 @ W1); H0 == I on fast path) ----
    hw1 = mm(h0_ref[...], w1_ref[...]) if has_h0 else w1_ref[...]
    h1 = jnp.maximum(propagate(hw1), 0.0)              # [N, F1]

    # ---- layer 2 ----
    h2 = jnp.maximum(propagate(mm(h1, w2_ref[...])), 0.0)    # [N, F2]

    # ---- layer 3 ----
    if tag is None:
        h3 = jnp.maximum(propagate(mm(h2, w3_ref[...])), 0.0)
        o_ref[...] = h3.astype(o_ref.dtype)
    else:
        # Left-associated single-row path:
        #   H3[tag] = ReLU( (A_hat[tag,:] @ H2) @ W3 )
        #           = ReLU( s_tag * (A_tilde[tag,:] @ (s * H2)) @ W3 )
        # Tag row is loaded straight from the VMEM ref (tiny vld), not sliced
        # out of a live [N, N] vreg value.
        a_tag = a_ref[tag:tag + 1, :].astype(f32)                       # [1, N]
        onehot = (lax.broadcasted_iota(jnp.int32, a_tag.shape, 1) == tag).astype(f32)
        row = a_tag + onehot                                            # A_tilde[tag, :]
        s_tag = lax.rsqrt(jnp.sum(row))                                 # d_tag^{-1/2}
        v = mm(row, s * h2)                                             # [1, F2]
        r = mm(v, w3_ref[...])                                          # [1, F3]
        o_ref[...] = jnp.maximum(s_tag * r, 0.0).astype(o_ref.dtype)


def _full_spec(shape):
    # Single full-array block resident in VMEM (all operands <= 200x200).
    return pl.BlockSpec(shape, lambda: (0,) * len(shape))


def _cost(flops, in_arrays, out_bytes, transcendentals):
    bytes_accessed = int(sum(int(x.size) * x.dtype.itemsize for x in in_arrays) + out_bytes)
    return pl.CostEstimate(flops=int(flops), transcendentals=int(transcendentals),
                           bytes_accessed=bytes_accessed)


def my_model_2_forward(A, W1, W2, W3, h0=None, tag=TAG, use_bf16=True):
    """Matches MyModel_2.forward(h0, tag) for a single graph.

    h0=None uses the module's fixed H0 = eye(N) (fast path: no identity matmul/DMA).
    tag=None returns H3 [N, F3]; otherwise returns H3[tag, :] (shape [F3]).
    `tag` must be a static Python int (it is 27 in the module).
    """
    assert tag is None or isinstance(tag, int), "tag must be a static Python int or None"
    N = A.shape[0]
    dt = jnp.bfloat16 if use_bf16 else jnp.float32

    A_k = A.astype(dt)
    W1_k, W2_k = W1.astype(dt), W2.astype(dt)
    if tag is None:
        # Lane-dense output: zero-pad W3 to 128 columns, slice back in wrapper.
        W3_k = jnp.pad(W3, ((0, 0), (0, _LANE - F3))).astype(dt)
        out_shape = (N, _LANE)
    else:
        W3_k = W3.astype(dt)
        out_shape = (1, F3)

    inputs = [A_k] + ([h0.astype(dt)] if h0 is not None else []) + [W1_k, W2_k, W3_k]
    kernel = functools.partial(_gcn3_kernel, tag=tag, has_h0=h0 is not None)

    flops = 2 * (N * N * F1 + N * F1 * F2 + N * N * F2) + (0 if tag is not None else 2 * N * N * F3)
    out = pl.pallas_call(
        kernel,
        out_shape=jax.ShapeDtypeStruct(out_shape, jnp.float32),
        in_specs=[_full_spec(x.shape) for x in inputs],
        out_specs=_full_spec(out_shape),
        cost_estimate=_cost(flops, inputs, out_shape[0] * out_shape[1] * 4, N + 1),
    )(*inputs)

    if tag is None:
        return out[:, :F3]
    return out[0]          # (F3,)


def my_model_2_forward_batched(A_b, W1, W2, W3, tag=TAG, use_bf16=True):
    """B forwards (B graphs, shared weights, same static tag) in ONE pallas_call.

    grid=(B,) with dimension_semantics=("parallel",): amortizes per-call launch /
    DMA overhead and lets the two TensorCores on v7x split the batch.
    """
    assert isinstance(tag, int), "batched path requires a static integer tag"
    B, N, _ = A_b.shape
    dt = jnp.bfloat16 if use_bf16 else jnp.float32

    A_k = A_b.astype(dt)
    W1_k, W2_k, W3_k = W1.astype(dt), W2.astype(dt), W3.astype(dt)
    kernel = functools.partial(_gcn3_kernel, tag=tag, has_h0=False)

    grid_spec = pltpu.PrefetchScalarGridSpec(
        num_scalar_prefetch=0,
        grid=(B,),
        in_specs=[
            pl.BlockSpec((None, N, N), lambda b: (b, 0, 0)),      # per-graph adjacency
            pl.BlockSpec(W1_k.shape, lambda b: (0, 0)),           # shared weights
            pl.BlockSpec(W2_k.shape, lambda b: (0, 0)),
            pl.BlockSpec(W3_k.shape, lambda b: (0, 0)),
        ],
        out_specs=pl.BlockSpec((None, 1, F3), lambda b: (b, 0, 0)),
    )

    flops = B * 2 * (N * N * F1 + N * F1 * F2 + N * N * F2)
    out = pl.pallas_call(
        kernel,
        out_shape=jax.ShapeDtypeStruct((B, 1, F3), jnp.float32),
        grid_spec=grid_spec,
        compiler_params=pltpu.CompilerParams(dimension_semantics=("parallel",)),
        cost_estimate=_cost(flops, [A_k, W1_k, W2_k, W3_k], B * F3 * 4, B * (N + 1)),
    )(A_k, W1_k, W2_k, W3_k)
    return out[:, 0, :]    # (B, F3)


def _reference_forward(A, H0, W1, W2, W3, tag):
    """Pure-JAX f32 reference with the original (left-associated) formulation."""
    N = A.shape[0]
    a_tilde = A + jnp.eye(N, dtype=A.dtype)
    d = jnp.sum(a_tilde, axis=1)
    dis = 1.0 / jnp.sqrt(d)
    a_hat = a_tilde * dis[:, None] * dis[None, :]
    h = H0
    for w in (W1, W2, W3):
        h = jnp.maximum(a_hat @ h @ w, 0.0)
    return h if tag is None else h[tag]


def _make_inputs():
    """Deterministic synthetic graphs + weights (stand-in for the networkx BA graph / torch.randn)."""
    key = jax.random.PRNGKey(0)
    k_a, k_a2, k_w1, k_w2, k_w3 = jax.random.split(key, 5)

    def rand_adj(k):
        # Sparse-ish symmetric 0/1 adjacency with zero diagonal (BA-graph stand-in).
        upper = (jax.random.uniform(k, (N_V, N_V)) < 0.02).astype(jnp.float32)
        upper = jnp.triu(upper, k=1)
        return upper + upper.T

    A = rand_adj(k_a)
    A2 = rand_adj(k_a2)
    W1 = jax.random.normal(k_w1, (N_V, F1), dtype=jnp.float32)   # GCN(200, 100)
    W2 = jax.random.normal(k_w2, (F1, F2), dtype=jnp.float32)    # GCN(100, 50)
    W3 = jax.random.normal(k_w3, (F2, F3), dtype=jnp.float32)    # GCN(50, 20)
    return A, A2, W1, W2, W3


if __name__ == "__main__":
    A, A2, W1, W2, W3 = _make_inputs()
    H0 = jnp.eye(N_V, dtype=jnp.float32)                  # module's fixed feature matrix

    ref_row = _reference_forward(A, H0, W1, W2, W3, TAG)
    scale = float(jnp.max(jnp.abs(ref_row))) + 1e-6

    # 1) fast single-graph path (H0 == I baked in, only row `tag` computed/written).
    out = my_model_2_forward(A, W1, W2, W3, tag=TAG)
    jax.block_until_ready(out)
    assert out.shape == (F3,)
    err = float(jnp.max(jnp.abs(out - ref_row)))
    assert err <= 0.05 * scale + 1e-3, (err, scale)

    # 2) general-h0 path (explicit feature matrix) — same result.
    out_gen = my_model_2_forward(A, W1, W2, W3, h0=H0, tag=TAG)
    jax.block_until_ready(out_gen)
    err_gen = float(jnp.max(jnp.abs(out_gen - ref_row)))
    assert err_gen <= 0.05 * scale + 1e-3, (err_gen, scale)

    # 3) tag=None path (full [200, 20] output, lane-dense store inside the kernel).
    out_full = my_model_2_forward(A, W1, W2, W3, tag=None)
    jax.block_until_ready(out_full)
    assert out_full.shape == (N_V, F3)
    ref_full = _reference_forward(A, H0, W1, W2, W3, None)
    scale_f = float(jnp.max(jnp.abs(ref_full))) + 1e-6
    err_full = float(jnp.max(jnp.abs(out_full - ref_full)))
    assert err_full <= 0.05 * scale_f + 1e-3, (err_full, scale_f)

    # 4) batched path: B graphs per pallas_call, grid=(B,) "parallel".
    A_b = jnp.stack([A, A2])
    out_b = my_model_2_forward_batched(A_b, W1, W2, W3, tag=TAG)
    jax.block_until_ready(out_b)
    assert out_b.shape == (2, F3)
    ref_row2 = _reference_forward(A2, H0, W1, W2, W3, TAG)
    scale2 = float(jnp.max(jnp.abs(ref_row2))) + 1e-6
    err_b0 = float(jnp.max(jnp.abs(out_b[0] - ref_row)))
    err_b1 = float(jnp.max(jnp.abs(out_b[1] - ref_row2)))
    assert err_b0 <= 0.05 * scale + 1e-3, (err_b0, scale)
    assert err_b1 <= 0.05 * scale2 + 1e-3, (err_b1, scale2)

    print("KERNEL_OK")
</pallas_src>

<mosaic_0001>
module attributes {stable_mosaic.version = 11 : i64} {
  func.func @_gcn3_kernel(%arg0: memref<200x200xbf16, #tpu.memory_space<vmem>>, %arg1: memref<200x100xbf16, #tpu.memory_space<vmem>>, %arg2: memref<100x50xbf16, #tpu.memory_space<vmem>>, %arg3: memref<50x20xbf16, #tpu.memory_space<vmem>>, %arg4: memref<1x20xf32, #tpu.memory_space<vmem>>) attributes {dimension_semantics = [], scalar_prefetch = 0 : i64, scratch_operands = 0 : i64, tpu.core_type = #tpu.core_type<tc>} {
    %c0 = arith.constant 0 : index
    %c0_0 = arith.constant 0 : index
    %0 = vector.load %arg0[%c0, %c0_0] : memref<200x200xbf16, #tpu.memory_space<vmem>>, vector<200x200xbf16>
    %1 = arith.extf %0 : vector<200x200xbf16> to vector<200x200xf32>
    %cst = arith.constant dense<0.000000e+00> : vector<200xf32>
    %2 = vector.multi_reduction <add>, %1, %cst [1] : vector<200x200xf32> to vector<200xf32>
    %3 = vector.shape_cast %2 : vector<200xf32> to vector<200x1xf32>
    %cst_1 = arith.constant 1.000000e+00 : f32
    %4 = vector.broadcast %cst_1 : f32 to vector<200x1xf32>
    %5 = arith.addf %3, %4 : vector<200x1xf32>
    %6 = math.rsqrt %5 : vector<200x1xf32>
    %c0_2 = arith.constant 0 : index
    %c0_3 = arith.constant 0 : index
    %7 = vector.load %arg1[%c0_2, %c0_3] : memref<200x100xbf16, #tpu.memory_space<vmem>>, vector<200x100xbf16>
    %8 = arith.extf %7 : vector<200x100xbf16> to vector<200x100xf32>
    %9 = vector.broadcast %6 : vector<200x1xf32> to vector<200x100xf32>
    %10 = arith.mulf %9, %8 : vector<200x100xf32>
    %11 = arith.truncf %10 : vector<200x100xf32> to vector<200x100xbf16>
    %cst_4 = arith.constant dense<0.000000e+00> : vector<200x100xf32>
    %12 = tpu.matmul %0, %11, %cst_4 {dimension_numbers = #tpu.dot_dimension_numbers<[1], [0], [0], [1], [0, 0, 1, 1], [], []>} : vector<200x200xbf16>, vector<200x100xbf16>, vector<200x100xf32> -> vector<200x100xf32>
    %13 = arith.addf %12, %10 : vector<200x100xf32>
    %14 = vector.broadcast %6 : vector<200x1xf32> to vector<200x100xf32>
    %15 = arith.mulf %14, %13 : vector<200x100xf32>
    %cst_5 = arith.constant 0.000000e+00 : f32
    %16 = vector.broadcast %cst_5 : f32 to vector<200x100xf32>
    %17 = arith.maximumf %15, %16 : vector<200x100xf32>
    %c0_6 = arith.constant 0 : index
    %c0_7 = arith.constant 0 : index
    %18 = vector.load %arg2[%c0_6, %c0_7] : memref<100x50xbf16, #tpu.memory_space<vmem>>, vector<100x50xbf16>
    %19 = arith.truncf %17 : vector<200x100xf32> to vector<200x100xbf16>
    %cst_8 = arith.constant dense<0.000000e+00> : vector<200x50xf32>
    %20 = tpu.matmul %19, %18, %cst_8 {dimension_numbers = #tpu.dot_dimension_numbers<[1], [0], [0], [1], [0, 0, 1, 1], [], []>} : vector<200x100xbf16>, vector<100x50xbf16>, vector<200x50xf32> -> vector<200x50xf32>
    %21 = vector.broadcast %6 : vector<200x1xf32> to vector<200x50xf32>
    %22 = arith.mulf %21, %20 : vector<200x50xf32>
    %23 = arith.truncf %22 : vector<200x50xf32> to vector<200x50xbf16>
    %cst_9 = arith.constant dense<0.000000e+00> : vector<200x50xf32>
    %24 = tpu.matmul %0, %23, %cst_9 {dimension_numbers = #tpu.dot_dimension_numbers<[1], [0], [0], [1], [0, 0, 1, 1], [], []>} : vector<200x200xbf16>, vector<200x50xbf16>, vector<200x50xf32> -> vector<200x50xf32>
    %25 = arith.addf %24, %22 : vector<200x50xf32>
    %26 = vector.broadcast %6 : vector<200x1xf32> to vector<200x50xf32>
    %27 = arith.mulf %26, %25 : vector<200x50xf32>
    %cst_10 = arith.constant 0.000000e+00 : f32
    %28 = vector.broadcast %cst_10 : f32 to vector<200x50xf32>
    %29 = arith.maximumf %27, %28 : vector<200x50xf32>
    %c27 = arith.constant 27 : index
    %c0_11 = arith.constant 0 : index
    %30 = vector.load %arg0[%c27, %c0_11] : memref<200x200xbf16, #tpu.memory_space<vmem>>, vector<1x200xbf16>
    %31 = arith.extf %30 : vector<1x200xbf16> to vector<1x200xf32>
    %32 = tpu.iota {dimensions = array<i32: 1>} : vector<1x200xi32>
    %c27_i32 = arith.constant 27 : i32
    %33 = vector.broadcast %c27_i32 : i32 to vector<1x200xi32>
    %34 = arith.cmpi eq, %32, %33 : vector<1x200xi32>
    %35 = arith.extui %34 : vector<1x200xi1> to vector<1x200xi32>
    %36 = arith.sitofp %35 : vector<1x200xi32> to vector<1x200xf32>
    %37 = arith.addf %31, %36 : vector<1x200xf32>
    %38 = vector.shape_cast %37 : vector<1x200xf32> to vector<1x1x200xf32>
    %cst_12 = arith.constant dense<0.000000e+00> : vector<1xf32>
    %39 = vector.multi_reduction <add>, %38, %cst_12 [1, 2] : vector<1x1x200xf32> to vector<1xf32>
    %40 = vector.shape_cast %39 : vector<1xf32> to vector<1x1x1xf32>
    %41 = vector.extract %40[0, 0, 0] : f32 from vector<1x1x1xf32>
    %42 = math.rsqrt %41 : f32
    %43 = vector.broadcast %6 : vector<200x1xf32> to vector<200x50xf32>
    %44 = arith.mulf %43, %29 : vector<200x50xf32>
    %45 = arith.truncf %37 : vector<1x200xf32> to vector<1x200xbf16>
    %46 = arith.truncf %44 : vector<200x50xf32> to vector<200x50xbf16>
    %cst_13 = arith.constant dense<0.000000e+00> : vector<1x50xf32>
    %47 = tpu.matmul %45, %46, %cst_13 {dimension_numbers = #tpu.dot_dimension_numbers<[1], [0], [0], [1], [0, 0, 1, 1], [], []>} : vector<1x200xbf16>, vector<200x50xbf16>, vector<1x50xf32> -> vector<1x50xf32>
    %c0_14 = arith.constant 0 : index
    %c0_15 = arith.constant 0 : index
    %48 = vector.load %arg3[%c0_14, %c0_15] : memref<50x20xbf16, #tpu.memory_space<vmem>>, vector<50x20xbf16>
    %49 = arith.truncf %47 : vector<1x50xf32> to vector<1x50xbf16>
    %cst_16 = arith.constant dense<0.000000e+00> : vector<1x20xf32>
    %50 = tpu.matmul %49, %48, %cst_16 {dimension_numbers = #tpu.dot_dimension_numbers<[1], [0], [0], [1], [0, 0, 1, 1], [], []>} : vector<1x50xbf16>, vector<50x20xbf16>, vector<1x20xf32> -> vector<1x20xf32>
    %51 = vector.broadcast %42 : f32 to vector<1x20xf32>
    %52 = arith.mulf %51, %50 : vector<1x20xf32>
    %cst_17 = arith.constant 0.000000e+00 : f32
    %53 = vector.broadcast %cst_17 : f32 to vector<1x20xf32>
    %54 = arith.maximumf %52, %53 : vector<1x20xf32>
    %c0_18 = arith.constant 0 : index
    %c0_19 = arith.constant 0 : index
    %55 = vector.load %arg4[%c0_18, %c0_19] : memref<1x20xf32, #tpu.memory_space<vmem>>, vector<1x20xf32>
    tpu.vector_store %arg4[%c0_18, %c0_19], %54 {strides = array<i32>} : memref<1x20xf32, #tpu.memory_space<vmem>>, vector<1x20xf32>,
    return
  }
}

</mosaic_0001>

<llo_original>
// kernel: tpu_custom_call.1
$region0: #{tpu_custom_call.1}
  #allocation0 [shape = 'u32[]', space=smem, size = 0x4, offset = 0x4, fixed_abs, tag = 'smem constant byte address 0x4 - core index']
  #allocation1 [shape = 'u32[72,128]{1,0:T(1,128)}', space=vmem, size = 0x9000, scoped, tag = 'internal scratch']
  %s0 = inlined_call_operand.hbm [shape: bf16[200,200], index: 0, kind: input, shape index: {}]
  %s1 = inlined_call_operand.vmem [shape: bf16[200,100], index: 1, kind: input, shape index: {}]
  %s2 = inlined_call_operand.vmem [shape: bf16[100,50], index: 2, kind: input, shape index: {}]
  %s3 = inlined_call_operand.vmem [shape: bf16[50,20], index: 3, kind: input, shape index: {}]
  %s4 = inlined_call_operand.hbm [shape: f32[1,20], index: 4, kind: output, shape index: {}]
  %s5 = sld [smem:[#allocation0]]
  $region30: #{tpu_custom_call.1} parent=0
    _
  %s7 = ssub.s32 1, %s5
  %s8 = scalar_select 0, %s7, %s5
  $region1: #{tpu_custom_call.1} parent=0
    #allocation2 [shape = 'u8[102400]{0}', space=vmem, size = 0x19000, scoped, tag = 'input window, operand 0, single buffered']
    #allocation3 [shape = 's32[1]{0}', space=sflag, size = 0x4, scoped, tag = 'scoped memory for tpu_custom_call.1']
    #allocation4 [shape = 's32[1]{0}', space=sflag, size = 0x4, scoped, tag = 'scoped memory for tpu_custom_call.1']
    #allocation5 [shape = 'u8[512]{0}', space=vmem, size = 0x400, scoped, tag = 'output window, operand 0, single buffered']
    %9 = vsyncpa [#allocation3], 0
    %10 = vsyncpa [#allocation4], 0
    // Predicated region
    $region2: #{tpu_custom_call.1} parent=1 // pred_check
      _
    $region3: #{tpu_custom_call.1} parent=1 // pred_check_branch
      %12 = sbr.rel (0) target = $region5
    $region4: #{tpu_custom_call.1} parent=1 // pred_region
      %14 = vsyncadd [#allocation3], 0
      %s15 = sshll.u32 %s0, 4
      %s16 = int_to_ptr.hbm [resolvable:$true] %s15
      %s17 = sshll.u32 [#allocation2], 4
      %s18 = int_to_ptr.vmem [resolvable:$true] %s17
      %23 = dma.hbm_to_vmem [thread:$0]  %s16, 3200, %s18, [#allocation3], 128, 128, 8
    $region5: #{tpu_custom_call.1} parent=1 // pred_fallthru
      _
    // Predicated region
    $region6: #{tpu_custom_call.1} parent=1 // pred_check
      _
    $region7: #{tpu_custom_call.1} parent=1 // pred_check_branch
      %25 = sbr.rel (0) target = $region9
    $region8: #{tpu_custom_call.1} parent=1 // pred_region
      _
    $region9: #{tpu_custom_call.1} parent=1 // pred_fallthru
      _
    // Predicated region
    $region10: #{tpu_custom_call.1} parent=1 // pred_check
      _
    $region11: #{tpu_custom_call.1} parent=1 // pred_check_branch
      %27 = sbr.rel (0) target = $region13
    $region12: #{tpu_custom_call.1} parent=1 // pred_region
      _
    $region13: #{tpu_custom_call.1} parent=1 // pred_fallthru
      _
    // Predicated region
    $region14: #{tpu_custom_call.1} parent=1 // pred_check
      _
    $region15: #{tpu_custom_call.1} parent=1 // pred_check_branch
      %29 = sbr.rel (0) target = $region17
    $region16: #{tpu_custom_call.1} parent=1 // pred_region
      _
    $region17: #{tpu_custom_call.1} parent=1 // pred_fallthru
      _
    // Predicated region
    $region18: #{tpu_custom_call.1} parent=1 // pred_check
      _
    $region19: #{tpu_custom_call.1} parent=1 // pred_check_branch
      %31 = sbr.rel (0) target = $region21
    $region20: #{tpu_custom_call.1} parent=1 // pred_region
      %33 = dma.done [#allocation3], 3200
    $region21: #{tpu_custom_call.1} parent=1 // pred_fallthru
      _
    %v35 = vld [vmem:[#allocation2] sm:$0xff]
    %v36 = vld [vmem:[#allocation2 + $0x8] sm:$0xff]
    %v37 = vld [vmem:[#allocation2 + $0x10] sm:$0xff]
    %v38 = vld [vmem:[#allocation2 + $0x18] sm:$0xff]
    %v39 = vld [vmem:[#allocation2 + $0x20] sm:$0xff]
    %v40 = vld [vmem:[#allocation2 + $0x28] sm:$0xff]
    %v41 = vld [vmem:[#allocation2 + $0x30] sm:$0xff]
    %v42 = vld [vmem:[#allocation2 + $0x38] sm:$0xff]
    %v43 = vld [vmem:[#allocation2 + $0x40] sm:$0xff]
    %v44 = vld [vmem:[#allocation2 + $0x48] sm:$0xff]
    %v45 = vld [vmem:[#allocation2 + $0x50] sm:$0xff]
    %v46 = vld [vmem:[#allocation2 + $0x58] sm:$0xff]
    %v47 = vld [vmem:[#allocation2 + $0x60] sm:$0xff]
    %v48 = vld [vmem:[#allocation2 + $0x68] sm:$0xff]
    %v49 = vld [vmem:[#allocation2 + $0x70] sm:$0xff]
    %v50 = vld [vmem:[#allocation2 + $0x78] sm:$0xff]
    %v51 = vld [vmem:[#allocation2 + $0x80] sm:$0xff]
    %v52 = vld [vmem:[#allocation2 + $0x88] sm:$0xff]
    %v53 = vld [vmem:[#allocation2 + $0x90] sm:$0xff]
    %v54 = vld [vmem:[#allocation2 + $0x98] sm:$0xff]
    %v55 = vld [vmem:[#allocation2 + $0xa0] sm:$0xff]
    %v56 = vld [vmem:[#allocation2 + $0xa8] sm:$0xff]
    %v57 = vld [vmem:[#allocation2 + $0xb0] sm:$0xff]
    %v58 = vld [vmem:[#allocation2 + $0xb8] sm:$0xff]
    %v59 = vld [vmem:[#allocation2 + $0xc0] sm:$0xff]
    %v60 = vunpack.c.l.bf16 %v35
    %v61 = vunpack.c.h.bf16 %v35
    %v62 = vunpack.c.l.bf16 %v36
    %v63 = vunpack.c.h.bf16 %v36
    %v64 = vunpack.c.l.bf16 %v37
    %v65 = vunpack.c.h.bf16 %v37
    %v66 = vunpack.c.l.bf16 %v38
    %v67 = vunpack.c.h.bf16 %v38
    %v68 = vunpack.c.l.bf16 %v39
    %v69 = vunpack.c.h.bf16 %v39
    %v70 = vunpack.c.l.bf16 %v40
    %v71 = vunpack.c.h.bf16 %v40
    %v72 = vunpack.c.l.bf16 %v41
    %v73 = vunpack.c.h.bf16 %v41
    %v74 = vunpack.c.l.bf16 %v42
    %v75 = vunpack.c.h.bf16 %v42
    %v76 = vunpack.c.l.bf16 %v43
    %v77 = vunpack.c.h.bf16 %v43
    %v78 = vunpack.c.l.bf16 %v44
    %v79 = vunpack.c.h.bf16 %v44
    %v80 = vunpack.c.l.bf16 %v45
    %v81 = vunpack.c.h.bf16 %v45
    %v82 = vunpack.c.l.bf16 %v46
    %v83 = vunpack.c.h.bf16 %v46
    %v84 = vunpack.c.l.bf16 %v47
    %v85 = vunpack.c.h.bf16 %v47
    %v86 = vunpack.c.l.bf16 %v48
    %v87 = vunpack.c.h.bf16 %v48
    %v88 = vunpack.c.l.bf16 %v49
    %v89 = vunpack.c.h.bf16 %v49
    %v90 = vunpack.c.l.bf16 %v50
    %v91 = vunpack.c.h.bf16 %v50
    %v92 = vunpack.c.l.bf16 %v51
    %v93 = vunpack.c.h.bf16 %v51
    %v94 = vunpack.c.l.bf16 %v52
    %v95 = vunpack.c.h.bf16 %v52
    %v96 = vunpack.c.l.bf16 %v53
    %v97 = vunpack.c.h.bf16 %v53
    %v98 = vunpack.c.l.bf16 %v54
    %v99 = vunpack.c.h.bf16 %v54
    %v100 = vunpack.c.l.bf16 %v55
    %v101 = vunpack.c.h.bf16 %v55
    %v102 = vunpack.c.l.bf16 %v56
    %v103 = vunpack.c.h.bf16 %v56
    %v104 = vunpack.c.l.bf16 %v57
    %v105 = vunpack.c.h.bf16 %v57
    %v106 = vunpack.c.l.bf16 %v58
    %v107 = vunpack.c.h.bf16 %v58
    %v108 = vunpack.c.l.bf16 %v59
    %v109 = vunpack.c.h.bf16 %v59
    %vm110 = vcmask 588800
    %v111 = vsel %vm110, %v61, 0.0
    %v112 = vadd.f32 %v60, %v111
    %113 = vadd.xlane.f32.xlu0 %v112
    %v114 = vpop.xlane.xlu0 %113
    %v115 = vsel %vm110, %v63, 0.0
    %v116 = vadd.f32 %v62, %v115
    %117 = vadd.xlane.f32.xlu0 %v116
    %v118 = vpop.xlane.xlu0 %117
    %v119 = vsel %vm110, %v65, 0.0
    %v120 = vadd.f32 %v64, %v119
    %121 = vadd.xlane.f32.xlu0 %v120
    %v122 = vpop.xlane.xlu0 %121
    %v123 = vsel %vm110, %v67, 0.0
    %v124 = vadd.f32 %v66, %v123
    %125 = vadd.xlane.f32.xlu0 %v124
    %v126 = vpop.xlane.xlu0 %125
    %v127 = vsel %vm110, %v69, 0.0
    %v128 = vadd.f32 %v68, %v127
    %129 = vadd.xlane.f32.xlu0 %v128
    %v130 = vpop.xlane.xlu0 %129
    %v131 = vsel %vm110, %v71, 0.0
    %v132 = vadd.f32 %v70, %v131
    %133 = vadd.xlane.f32.xlu0 %v132
    %v134 = vpop.xlane.xlu0 %133
    %v135 = vsel %vm110, %v73, 0.0
    %v136 = vadd.f32 %v72, %v135
    %137 = vadd.xlane.f32.xlu0 %v136
    %v138 = vpop.xlane.xlu0 %137
    %v139 = vsel %vm110, %v75, 0.0
    %v140 = vadd.f32 %v74, %v139
    %141 = vadd.xlane.f32.xlu0 %v140
    %v142 = vpop.xlane.xlu0 %141
    %v143 = vsel %vm110, %v77, 0.0
    %v144 = vadd.f32 %v76, %v143
    %145 = vadd.xlane.f32.xlu0 %v144
    %v146 = vpop.xlane.xlu0 %145
    %v147 = vsel %vm110, %v79, 0.0
    %v148 = vadd.f32 %v78, %v147
    %149 = vadd.xlane.f32.xlu0 %v148
    %v150 = vpop.xlane.xlu0 %149
    %v151 = vsel %vm110, %v81, 0.0
    %v152 = vadd.f32 %v80, %v151
    %153 = vadd.xlane.f32.xlu0 %v152
    %v154 = vpop.xlane.xlu0 %153
    %v155 = vsel %vm110, %v83, 0.0
    %v156 = vadd.f32 %v82, %v155
    %157 = vadd.xlane.f32.xlu0 %v156
    %v158 = vpop.xlane.xlu0 %157
    %v159 = vsel %vm110, %v85, 0.0
    %v160 = vadd.f32 %v84, %v159
    %161 = vadd.xlane.f32.xlu0 %v160
    %v162 = vpop.xlane.xlu0 %161
    %v163 = vsel %vm110, %v87, 0.0
    %v164 = vadd.f32 %v86, %v163
    %165 = vadd.xlane.f32.xlu0 %v164
    %v166 = vpop.xlane.xlu0 %165
    %v167 = vsel %vm110, %v89, 0.0
    %v168 = vadd.f32 %v88, %v167
    %169 = vadd.xlane.f32.xlu0 %v168
    %v170 = vpop.xlane.xlu0 %169
    %v171 = vsel %vm110, %v91, 0.0
    %v172 = vadd.f32 %v90, %v171
    %173 = vadd.xlane.f32.xlu0 %v172
    %v174 = vpop.xlane.xlu0 %173
    %v175 = vsel %vm110, %v93, 0.0
    %v176 = vadd.f32 %v92, %v175
    %177 = vadd.xlane.f32.xlu0 %v176
    %v178 = vpop.xlane.xlu0 %177
    %v179 = vsel %vm110, %v95, 0.0
    %v180 = vadd.f32 %v94, %v179
    %181 = vadd.xlane.f32.xlu0 %v180
    %v182 = vpop.xlane.xlu0 %181
    %v183 = vsel %vm110, %v97, 0.0
    %v184 = vadd.f32 %v96, %v183
    %185 = vadd.xlane.f32.xlu0 %v184
    %v186 = vpop.xlane.xlu0 %185
    %v187 = vsel %vm110, %v99, 0.0
    %v188 = vadd.f32 %v98, %v187
    %189 = vadd.xlane.f32.xlu0 %v188
    %v190 = vpop.xlane.xlu0 %189
    %v191 = vsel %vm110, %v101, 0.0
    %v192 = vadd.f32 %v100, %v191
    %193 = vadd.xlane.f32.xlu0 %v192
    %v194 = vpop.xlane.xlu0 %193
    %v195 = vsel %vm110, %v103, 0.0
    %v196 = vadd.f32 %v102, %v195
    %197 = vadd.xlane.f32.xlu0 %v196
    %v198 = vpop.xlane.xlu0 %197
    %v199 = vsel %vm110, %v105, 0.0
    %v200 = vadd.f32 %v104, %v199
    %201 = vadd.xlane.f32.xlu0 %v200
    %v202 = vpop.xlane.xlu0 %201
    %v203 = vsel %vm110, %v107, 0.0
    %v204 = vadd.f32 %v106, %v203
    %205 = vadd.xlane.f32.xlu0 %v204
    %v206 = vpop.xlane.xlu0 %205
    %v207 = vsel %vm110, %v109, 0.0
    %v208 = vadd.f32 %v108, %v207
    %209 = vadd.xlane.f32.xlu0 %v208
    %v210 = vpop.xlane.xlu0 %209
    %v211 = vadd.f32 %v114, 1.0
    %v212 = vadd.f32 %v118, 1.0
    %v213 = vadd.f32 %v122, 1.0
    %v214 = vadd.f32 %v126, 1.0
    %v215 = vadd.f32 %v130, 1.0
    %v216 = vadd.f32 %v134, 1.0
    %v217 = vadd.f32 %v138, 1.0
    %v218 = vadd.f32 %v142, 1.0
    %v219 = vadd.f32 %v146, 1.0
    %v220 = vadd.f32 %v150, 1.0
    %v221 = vadd.f32 %v154, 1.0
    %v222 = vadd.f32 %v158, 1.0
    %v223 = vadd.f32 %v162, 1.0
    %v224 = vadd.f32 %v166, 1.0
    %v225 = vadd.f32 %v170, 1.0
    %v226 = vadd.f32 %v174, 1.0
    %v227 = vadd.f32 %v178, 1.0
    %v228 = vadd.f32 %v182, 1.0
    %v229 = vadd.f32 %v186, 1.0
    %v230 = vadd.f32 %v190, 1.0
    %v231 = vadd.f32 %v194, 1.0
    %v232 = vadd.f32 %v198, 1.0
    %v233 = vadd.f32 %v202, 1.0
    %v234 = vadd.f32 %v206, 1.0
    %v235 = vadd.f32 %v210, 1.0
    %v236 = vrsqrt.pop %v211
    %v237 = vmul.f32 %v236, %v211
    %v238 = vmul.f32 %v237, %v236
    %v239 = vmul.f32 0.5, %v238
    %v240 = vsub.f32 1.5, %v239
    %v241 = vmul.f32 %v236, %v240
    %vm242 = vweird.f32 %v211
    %vm243 = vweird.f32 %v236
    %vm244 = vmor %vm242, %vm243
    %v245 = vsel %vm244, %v236, %v241
    %v246 = vrsqrt.pop %v212
    %v247 = vmul.f32 %v246, %v212
    %v248 = vmul.f32 %v247, %v246
    %v249 = vmul.f32 0.5, %v248
    %v250 = vsub.f32 1.5, %v249
    %v251 = vmul.f32 %v246, %v250
    %vm252 = vweird.f32 %v212
    %vm253 = vweird.f32 %v246
    %vm254 = vmor %vm252, %vm253
    %v255 = vsel %vm254, %v246, %v251
    %v256 = vrsqrt.pop %v213
    %v257 = vmul.f32 %v256, %v213
    %v258 = vmul.f32 %v257, %v256
    %v259 = vmul.f32 0.5, %v258
    %v260 = vsub.f32 1.5, %v259
    %v261 = vmul.f32 %v256, %v260
    %vm262 = vweird.f32 %v213
    %vm263 = vweird.f32 %v256
    %vm264 = vmor %vm262, %vm263
    %v265 = vsel %vm264, %v256, %v261
    %v266 = vrsqrt.pop %v214
    %v267 = vmul.f32 %v266, %v214
    %v268 = vmul.f32 %v267, %v266
    %v269 = vmul.f32 0.5, %v268
    %v270 = vsub.f32 1.5, %v269
    %v271 = vmul.f32 %v266, %v270
    %vm272 = vweird.f32 %v214
    %vm273 = vweird.f32 %v266
    %vm274 = vmor %vm272, %vm273
    %v275 = vsel %vm274, %v266, %v271
    %v276 = vrsqrt.pop %v215
    %v277 = vmul.f32 %v276, %v215
    %v278 = vmul.f32 %v277, %v276
    %v279 = vmul.f32 0.5, %v278
    %v280 = vsub.f32 1.5, %v279
    %v281 = vmul.f32 %v276, %v280
    %vm282 = vweird.f32 %v215
    %vm283 = vweird.f32 %v276
    %vm284 = vmor %vm282, %vm283
    %v285 = vsel %vm284, %v276, %v281
    %v286 = vrsqrt.pop %v216
    %v287 = vmul.f32 %v286, %v216
    %v288 = vmul.f32 %v287, %v286
    %v289 = vmul.f32 0.5, %v288
    %v290 = vsub.f32 1.5, %v289
    %v291 = vmul.f32 %v286, %v290
    %vm292 = vweird.f32 %v216
    %vm293 = vweird.f32 %v286
    %vm294 = vmor %vm292, %vm293
    %v295 = vsel %vm294, %v286, %v291
    %v296 = vrsqrt.pop %v217
    %v297 = vmul.f32 %v296, %v217
    %v298 = vmul.f32 %v297, %v296
    %v299 = vmul.f32 0.5, %v298
    %v300 = vsub.f32 1.5, %v299
    %v301 = vmul.f32 %v296, %v300
    %vm302 = vweird.f32 %v217
    %vm303 = vweird.f32 %v296
    %vm304 = vmor %vm302, %vm303
    %v305 = vsel %vm304, %v296, %v301
    %v306 = vrsqrt.pop %v218
    %v307 = vmul.f32 %v306, %v218
    %v308 = vmul.f32 %v307, %v306
    %v309 = vmul.f32 0.5, %v308
    %v310 = vsub.f32 1.5, %v309
    %v311 = vmul.f32 %v306, %v310
    %vm312 = vweird.f32 %v218
    %vm313 = vweird.f32 %v306
    %vm314 = vmor %vm312, %vm313
    %v315 = vsel %vm314, %v306, %v311
    %v316 = vrsqrt.pop %v219
    %v317 = vmul.f32 %v316, %v219
    %v318 = vmul.f32 %v317, %v316
    %v319 = vmul.f32 0.5, %v318
    %v320 = vsub.f32 1.5, %v319
    %v321 = vmul.f32 %v316, %v320
    %vm322 = vweird.f32 %v219
    %vm323 = vweird.f32 %v316
    %vm324 = vmor %vm322, %vm323
    %v325 = vsel %vm324, %v316, %v321
    %v326 = vrsqrt.pop %v220
    %v327 = vmul.f32 %v326, %v220
    %v328 = vmul.f32 %v327, %v326
    %v329 = vmul.f32 0.5, %v328
    %v330 = vsub.f32 1.5, %v329
    %v331 = vmul.f32 %v326, %v330
    %vm332 = vweird.f32 %v220
    %vm333 = vweird.f32 %v326
    %vm334 = vmor %vm332, %vm333
    %v335 = vsel %vm334, %v326, %v331
    %v336 = vrsqrt.pop %v221
    %v337 = vmul.f32 %v336, %v221
    %v338 = vmul.f32 %v337, %v336
    %v339 = vmul.f32 0.5, %v338
    %v340 = vsub.f32 1.5, %v339
    %v341 = vmul.f32 %v336, %v340
    %vm342 = vweird.f32 %v221
    %vm343 = vweird.f32 %v336
    %vm344 = vmor %vm342, %vm343
    %v345 = vsel %vm344, %v336, %v341
    %v346 = vrsqrt.pop %v222
    %v347 = vmul.f32 %v346, %v222
    %v348 = vmul.f32 %v347, %v346
    %v349 = vmul.f32 0.5, %v348
    %v350 = vsub.f32 1.5, %v349
    %v351 = vmul.f32 %v346, %v350
    %vm352 = vweird.f32 %v222
    %vm353 = vweird.f32 %v346
    %vm354 = vmor %vm352, %vm353
    %v355 = vsel %vm354, %v346, %v351
    %v356 = vrsqrt.pop %v223
    %v357 = vmul.f32 %v356, %v223
    %v358 = vmul.f32 %v357, %v356
    %v359 = vmul.f32 0.5, %v358
    %v360 = vsub.f32 1.5, %v359
    %v361 = vmul.f32 %v356, %v360
    %vm362 = vweird.f32 %v223
    %vm363 = vweird.f32 %v356
    %vm364 = vmor %vm362, %vm363
    %v365 = vsel %vm364, %v356, %v361
    %v366 = vrsqrt.pop %v224
    %v367 = vmul.f32 %v366, %v224
    %v368 = vmul.f32 %v367, %v366
    %v369 = vmul.f32 0.5, %v368
    %v370 = vsub.f32 1.5, %v369
    %v371 = vmul.f32 %v366, %v370
    %vm372 = vweird.f32 %v224
    %vm373 = vweird.f32 %v366
    %vm374 = vmor %vm372, %vm373
    %v375 = vsel %vm374, %v366, %v371
    %v376 = vrsqrt.pop %v225
    %v377 = vmul.f32 %v376, %v225
    %v378 = vmul.f32 %v377, %v376
    %v379 = vmul.f32 0.5, %v378
    %v380 = vsub.f32 1.5, %v379
    %v381 = vmul.f32 %v376, %v380
    %vm382 = vweird.f32 %v225
    %vm383 = vweird.f32 %v376
    %vm384 = vmor %vm382, %vm383
    %v385 = vsel %vm384, %v376, %v381
    %v386 = vrsqrt.pop %v226
    %v387 = vmul.f32 %v386, %v226
    %v388 = vmul.f32 %v387, %v386
    %v389 = vmul.f32 0.5, %v388
    %v390 = vsub.f32 1.5, %v389
    %v391 = vmul.f32 %v386, %v390
    %vm392 = vweird.f32 %v226
    %vm393 = vweird.f32 %v386
    %vm394 = vmor %vm392, %vm393
    %v395 = vsel %vm394, %v386, %v391
    %v396 = vrsqrt.pop %v227
    %v397 = vmul.f32 %v396, %v227
    %v398 = vmul.f32 %v397, %v396
    %v399 = vmul.f32 0.5, %v398
    %v400 = vsub.f32 1.5, %v399
    %v401 = vmul.f32 %v396, %v400
    %vm402 = vweird.f32 %v227
    %vm403 = vweird.f32 %v396
    %vm404 = vmor %vm402, %vm403
    %v405 = vsel %vm404, %v396, %v401
    %v406 = vrsqrt.pop %v228
    %v407 = vmul.f32 %v406, %v228
    %v408 = vmul.f32 %v407, %v406
    %v409 = vmul.f32 0.5, %v408
    %v410 = vsub.f32 1.5, %v409
    %v411 = vmul.f32 %v406, %v410
    %vm412 = vweird.f32 %v228
    %vm413 = vweird.f32 %v406
    %vm414 = vmor %vm412, %vm413
    %v415 = vsel %vm414, %v406, %v411
    %v416 = vrsqrt.pop %v229
    %v417 = vmul.f32 %v416, %v229
    %v418 = vmul.f32 %v417, %v416
    %v419 = vmul.f32 0.5, %v418
    %v420 = vsub.f32 1.5, %v419
    %v421 = vmul.f32 %v416, %v420
    %vm422 = vweird.f32 %v229
    %vm423 = vweird.f32 %v416
    %vm424 = vmor %vm422, %vm423
    %v425 = vsel %vm424, %v416, %v421
    %v426 = vrsqrt.pop %v230
    %v427 = vmul.f32 %v426, %v230
    %v428 = vmul.f32 %v427, %v426
    %v429 = vmul.f32 0.5, %v428
    %v430 = vsub.f32 1.5, %v429
    %v431 = vmul.f32 %v426, %v430
    %vm432 = vweird.f32 %v230
    %vm433 = vweird.f32 %v426
    %vm434 = vmor %vm432, %vm433
    %v435 = vsel %vm434, %v426, %v431
    %v436 = vrsqrt.pop %v231
    %v437 = vmul.f32 %v436, %v231
    %v438 = vmul.f32 %v437, %v436
    %v439 = vmul.f32 0.5, %v438
    %v440 = vsub.f32 1.5, %v439
    %v441 = vmul.f32 %v436, %v440
    %vm442 = vweird.f32 %v231
    %vm443 = vweird.f32 %v436
    %vm444 = vmor %vm442, %vm443
    %v445 = vsel %vm444, %v436, %v441
    %v446 = vrsqrt.pop %v232
    %v447 = vmul.f32 %v446, %v232
    %v448 = vmul.f32 %v447, %v446
    %v449 = vmul.f32 0.5, %v448
    %v450 = vsub.f32 1.5, %v449
    %v451 = vmul.f32 %v446, %v450
    %vm452 = vweird.f32 %v232
    %vm453 = vweird.f32 %v446
    %vm454 = vmor %vm452, %vm453
    %v455 = vsel %vm454, %v446, %v451
    %v456 = vrsqrt.pop %v233
    %v457 = vmul.f32 %v456, %v233
    %v458 = vmul.f32 %v457, %v456
    %v459 = vmul.f32 0.5, %v458
    %v460 = vsub.f32 1.5, %v459
    %v461 = vmul.f32 %v456, %v460
    %vm462 = vweird.f32 %v233
    %vm463 = vweird.f32 %v456
    %vm464 = vmor %vm462, %vm463
    %v465 = vsel %vm464, %v456, %v461
    %v466 = vrsqrt.pop %v234
    %v467 = vmul.f32 %v466, %v234
    %v468 = vmul.f32 %v467, %v466
    %v469 = vmul.f32 0.5, %v468
    %v470 = vsub.f32 1.5, %v469
    %v471 = vmul.f32 %v466, %v470
    %vm472 = vweird.f32 %v234
    %vm473 = vweird.f32 %v466
    %vm474 = vmor %vm472, %vm473
    %v475 = vsel %vm474, %v466, %v471
    %v476 = vrsqrt.pop %v235
    %v477 = vmul.f32 %v476, %v235
    %v478 = vmul.f32 %v477, %v476
    %v479 = vmul.f32 0.5, %v478
    %v480 = vsub.f32 1.5, %v479
    %v481 = vmul.f32 %v476, %v480
    %vm482 = vweird.f32 %v235
    %vm483 = vweird.f32 %v476
    %vm484 = vmor %vm482, %vm483
    %v485 = vsel %vm484, %v476, %v481
    %v486 = vld [vmem:[%s1] sm:$0xf]
    %v487 = vld [vmem:[%s1 + $0x4] sm:$0xf]
    %v488 = vld [vmem:[%s1 + $0x8] sm:$0xf]
    %v489 = vld [vmem:[%s1 + $0xc] sm:$0xf]
    %v490 = vld [vmem:[%s1 + $0x10] sm:$0xf]
    %v491 = vld [vmem:[%s1 + $0x14] sm:$0xf]
    %v492 = vld [vmem:[%s1 + $0x18] sm:$0xf]
    %v493 = vld [vmem:[%s1 + $0x1c] sm:$0xf]
    %v494 = vld [vmem:[%s1 + $0x20] sm:$0xf]
    %v495 = vld [vmem:[%s1 + $0x24] sm:$0xf]
    %v496 = vld [vmem:[%s1 + $0x28] sm:$0xf]
    %v497 = vld [vmem:[%s1 + $0x2c] sm:$0xf]
    %v498 = vld [vmem:[%s1 + $0x30] sm:$0xf]
    %v499 = vld [vmem:[%s1 + $0x34] sm:$0xf]
    %v500 = vld [vmem:[%s1 + $0x38] sm:$0xf]
    %v501 = vld [vmem:[%s1 + $0x3c] sm:$0xf]
    %v502 = vld [vmem:[%s1 + $0x40] sm:$0xf]
    %v503 = vld [vmem:[%s1 + $0x44] sm:$0xf]
    %v504 = vld [vmem:[%s1 + $0x48] sm:$0xf]
    %v505 = vld [vmem:[%s1 + $0x4c] sm:$0xf]
    %v506 = vld [vmem:[%s1 + $0x50] sm:$0xf]
    %v507 = vld [vmem:[%s1 + $0x54] sm:$0xf]
    %v508 = vld [vmem:[%s1 + $0x58] sm:$0xf]
    %v509 = vld [vmem:[%s1 + $0x5c] sm:$0xf]
    %v510 = vld [vmem:[%s1 + $0x60] sm:$0xf]
    %v511 = vunpack.c.l.bf16 %v486
    %v512 = vunpack.c.l.bf16 %v487
    %v513 = vunpack.c.l.bf16 %v488
    %v514 = vunpack.c.l.bf16 %v489
    %v515 = vunpack.c.l.bf16 %v490
    %v516 = vunpack.c.l.bf16 %v491
    %v517 = vunpack.c.l.bf16 %v492
    %v518 = vunpack.c.l.bf16 %v493
    %v519 = vunpack.c.l.bf16 %v494
    %v520 = vunpack.c.l.bf16 %v495
    %v521 = vunpack.c.l.bf16 %v496
    %v522 = vunpack.c.l.bf16 %v497
    %v523 = vunpack.c.l.bf16 %v498
    %v524 = vunpack.c.l.bf16 %v499
    %v525 = vunpack.c.l.bf16 %v500
    %v526 = vunpack.c.l.bf16 %v501
    %v527 = vunpack.c.l.bf16 %v502
    %v528 = vunpack.c.l.bf16 %v503
    %v529 = vunpack.c.l.bf16 %v504
    %v530 = vunpack.c.l.bf16 %v505
    %v531 = vunpack.c.l.bf16 %v506
    %v532 = vunpack.c.l.bf16 %v507
    %v533 = vunpack.c.l.bf16 %v508
    %v534 = vunpack.c.l.bf16 %v509
    %v535 = vunpack.c.l.bf16 %v510
    %v536 = vmul.f32 %v245, %v511
    %v537 = vmul.f32 %v255, %v512
    %v538 = vmul.f32 %v265, %v513
    %v539 = vmul.f32 %v275, %v514
    %v540 = vmul.f32 %v285, %v515
    %v541 = vmul.f32 %v295, %v516
    %v542 = vmul.f32 %v305, %v517
    %v543 = vmul.f32 %v315, %v518
    %v544 = vmul.f32 %v325, %v519
    %v545 = vmul.f32 %v335, %v520
    %v546 = vmul.f32 %v345, %v521
    %v547 = vmul.f32 %v355, %v522
    %v548 = vmul.f32 %v365, %v523
    %v549 = vmul.f32 %v375, %v524
    %v550 = vmul.f32 %v385, %v525
    %v551 = vmul.f32 %v395, %v526
    %v552 = vmul.f32 %v405, %v527
    %v553 = vmul.f32 %v415, %v528
    %v554 = vmul.f32 %v425, %v529
    %v555 = vmul.f32 %v435, %v530
    %v556 = vmul.f32 %v445, %v531
    %v557 = vmul.f32 %v455, %v532
    %v558 = vmul.f32 %v465, %v533
    %v559 = vmul.f32 %v475, %v534
    %v560 = vmul.f32 %v485, %v535
    %v561 = vpack.c.bf16 %v537, %v536
    %v562 = vpack.c.bf16 %v539, %v538
    %v563 = vpack.c.bf16 %v541, %v540
    %v564 = vpack.c.bf16 %v543, %v542
    %v565 = vpack.c.bf16 %v545, %v544
    %v566 = vpack.c.bf16 %v547, %v546
    %v567 = vpack.c.bf16 %v549, %v548
    %v568 = vpack.c.bf16 %v551, %v550
    %v569 = vpack.c.bf16 %v553, %v552
    %v570 = vpack.c.bf16 %v555, %v554
    %v571 = vpack.c.bf16 %v557, %v556
    %v572 = vpack.c.bf16 %v559, %v558
    %v573 = vpack.c.bf16 %v560, %v560
    %v599 = vunpack.c.l.b16 %v35
    %v600 = vunpack.c.h.b16 %v35
    %v601 = vunpack.c.l.b16 %v36
    %v602 = vunpack.c.h.b16 %v36
    %v603 = vunpack.c.l.b16 %v37
    %v604 = vunpack.c.h.b16 %v37
    %v605 = vunpack.c.l.b16 %v38
    %v606 = vunpack.c.h.b16 %v38
    %v607 = vunpack.c.l.b16 %v39
    %v608 = vunpack.c.h.b16 %v39
    %v609 = vunpack.c.l.b16 %v40
    %v610 = vunpack.c.h.b16 %v40
    %v611 = vunpack.c.l.b16 %v41
    %v612 = vunpack.c.h.b16 %v41
    %v613 = vunpack.c.l.b16 %v42
    %v614 = vunpack.c.h.b16 %v42
    %v615 = vunpack.c.l.b16 %v43
    %v616 = vunpack.c.h.b16 %v43
    %v617 = vunpack.c.l.b16 %v44
    %v618 = vunpack.c.h.b16 %v44
    %v619 = vunpack.c.l.b16 %v45
    %v620 = vunpack.c.h.b16 %v45
    %v621 = vunpack.c.l.b16 %v46
    %v622 = vunpack.c.h.b16 %v46
    %v623 = vunpack.c.l.b16 %v47
    %v624 = vunpack.c.h.b16 %v47
    %v625 = vunpack.c.l.b16 %v48
    %v626 = vunpack.c.h.b16 %v48
    %v627 = vunpack.c.l.b16 %v49
    %v628 = vunpack.c.h.b16 %v49
    %v629 = vunpack.c.l.b16 %v50
    %v630 = vunpack.c.h.b16 %v50
    %v631 = vunpack.c.l.b16 %v51
    %v632 = vunpack.c.h.b16 %v51
    %v633 = vunpack.c.l.b16 %v52
    %v634 = vunpack.c.h.b16 %v52
    %v635 = vunpack.c.l.b16 %v53
    %v636 = vunpack.c.h.b16 %v53
    %v637 = vunpack.c.l.b16 %v54
    %v638 = vunpack.c.h.b16 %v54
    %v639 = vunpack.c.l.b16 %v55
    %v640 = vunpack.c.h.b16 %v55
    %v641 = vunpack.c.l.b16 %v56
    %v642 = vunpack.c.h.b16 %v56
    %v643 = vunpack.c.l.b16 %v57
    %v644 = vunpack.c.h.b16 %v57
    %v645 = vunpack.c.l.b16 %v58
    %v646 = vunpack.c.h.b16 %v58
    %v647 = vunpack.c.l.b16 %v59
    %v648 = vunpack.c.h.b16 %v59
    %v649 = vpack.c.b16 %v601, %v599
    %v650 = vpack.c.b16 %v602, %v600
    %v651 = vpack.c.b16 %v605, %v603
    %v652 = vpack.c.b16 %v606, %v604
    %v653 = vpack.c.b16 %v609, %v607
    %v654 = vpack.c.b16 %v610, %v608
    %v655 = vpack.c.b16 %v613, %v611
    %v656 = vpack.c.b16 %v614, %v612
    %v657 = vpack.c.b16 %v617, %v615
    %v658 = vpack.c.b16 %v618, %v616
    %v659 = vpack.c.b16 %v621, %v619
    %v660 = vpack.c.b16 %v622, %v620
    %v661 = vpack.c.b16 %v625, %v623
    %v662 = vpack.c.b16 %v626, %v624
    %v663 = vpack.c.b16 %v629, %v627
    %v664 = vpack.c.b16 %v630, %v628
    %v665 = vpack.c.b16 %v633, %v631
    %v666 = vpack.c.b16 %v634, %v632
    %v667 = vpack.c.b16 %v637, %v635
    %v668 = vpack.c.b16 %v638, %v636
    %v669 = vpack.c.b16 %v641, %v639
    %v670 = vpack.c.b16 %v642, %v640
    %v671 = vpack.c.b16 %v645, %v643
    %v672 = vpack.c.b16 %v646, %v644
    %v673 = vpack.c.b16 %v647, %v647
    %v674 = vpack.c.b16 %v648, %v648
    %v689 = vsel %vm110, %v650, 0
    %v692 = vsel %vm110, %v652, 0
    %v695 = vsel %vm110, %v654, 0
    %v698 = vsel %vm110, %v656, 0
    %v701 = vsel %vm110, %v658, 0
    %v704 = vsel %vm110, %v660, 0
    %v707 = vsel %vm110, %v662, 0
    %v710 = vsel %vm110, %v664, 0
    %v713 = vsel %vm110, %v666, 0
    %v716 = vsel %vm110, %v668, 0
    %v719 = vsel %vm110, %v670, 0
    %v722 = vsel %vm110, %v672, 0
    %v725 = vsel %vm110, %v674, 0
    %vm727 = vcmask 1043456
    %v729 = vsel %vm727, %v573, 0
    %731 = vmatpush.bf16.msra.mxu0 %v568
    %732 = vmatpush.bf16.msra.mxu0 %v567
    %733 = vmatpush.bf16.msra.mxu0 %v566
    %734 = vmatpush.bf16.msra.mxu0 %v565
    %735 = vmatpush.bf16.msra.mxu0 %v564
    %736 = vmatpush.bf16.msra.mxu0 %v563
    %737 = vmatpush.bf16.msra.mxu0 %v562
    %738 = vmatpush.bf16.msra.mxu0 %v561
    %739 = vmatmul.bf16.gmra.mxu0 %v649
    %v740 = vpop.f32.mrf.mxu0
    %v741 = vadd.f32 %v536, %v740
    %v742 = vpop.f32.mrf.mxu0
    %v743 = vadd.f32 %v537, %v742
    %744 = vmatmul.bf16.gmra.mxu0 %v651
    %v745 = vpop.f32.mrf.mxu0
    %v746 = vadd.f32 %v538, %v745
    %v747 = vpop.f32.mrf.mxu0
    %v748 = vadd.f32 %v539, %v747
    %749 = vmatmul.bf16.gmra.mxu0 %v653
    %v750 = vpop.f32.mrf.mxu0
    %v751 = vadd.f32 %v540, %v750
    %v752 = vpop.f32.mrf.mxu0
    %v753 = vadd.f32 %v541, %v752
    %754 = vmatmul.bf16.gmra.mxu0 %v655
    %v755 = vpop.f32.mrf.mxu0
    %v756 = vadd.f32 %v542, %v755
    %v757 = vpop.f32.mrf.mxu0
    %v758 = vadd.f32 %v543, %v757
    %759 = vmatmul.bf16.gmra.mxu0 %v657
    %v760 = vpop.f32.mrf.mxu0
    %v761 = vadd.f32 %v544, %v760
    %v762 = vpop.f32.mrf.mxu0
    %v763 = vadd.f32 %v545, %v762
    %764 = vmatmul.bf16.gmra.mxu0 %v659
    %v765 = vpop.f32.mrf.mxu0
    %v766 = vadd.f32 %v546, %v765
    %v767 = vpop.f32.mrf.mxu0
    %v768 = vadd.f32 %v547, %v767
    %769 = vmatmul.bf16.gmra.mxu0 %v661
    %v770 = vpop.f32.mrf.mxu0
    %v771 = vadd.f32 %v548, %v770
    %v772 = vpop.f32.mrf.mxu0
    %v773 = vadd.f32 %v549, %v772
    %774 = vmatmul.bf16.gmra.mxu0 %v663
    %v775 = vpop.f32.mrf.mxu0
    %v776 = vadd.f32 %v550, %v775
    %v777 = vpop.f32.mrf.mxu0
    %v778 = vadd.f32 %v551, %v777
    %779 = vmatmul.bf16.gmra.mxu0 %v665
    %v780 = vpop.f32.mrf.mxu0
    %v781 = vadd.f32 %v552, %v780
    %v782 = vpop.f32.mrf.mxu0
    %v783 = vadd.f32 %v553, %v782
    %784 = vmatmul.bf16.gmra.mxu0 %v667
    %v785 = vpop.f32.mrf.mxu0
    %v786 = vadd.f32 %v554, %v785
    %v787 = vpop.f32.mrf.mxu0
    %v788 = vadd.f32 %v555, %v787
    %789 = vmatmul.bf16.gmra.mxu0 %v669
    %v790 = vpop.f32.mrf.mxu0
    %v791 = vadd.f32 %v556, %v790
    %v792 = vpop.f32.mrf.mxu0
    %v793 = vadd.f32 %v557, %v792
    %794 = vmatmul.bf16.gmra.mxu0 %v671
    %v795 = vpop.f32.mrf.mxu0
    %v796 = vadd.f32 %v558, %v795
    %v797 = vpop.f32.mrf.mxu0
    %v798 = vadd.f32 %v559, %v797
    %799 = vmatmul.bf16.gmra.mxu0 %v673
    %v800 = vpop.f32.mrf.mxu0
    %v801 = vadd.f32 %v560, %v800
    %v802 = vpop.f32.mrf.mxu0
    %803 = vdwg.mxu0
    %804 = vmatpush.bf16.msra.mxu0 0
    %805 = vmatpush.bf16.msra.mxu0 0
    %806 = vmatpush.bf16.msra.mxu0 0
    %807 = vmatpush.bf16.msra.mxu0 %v729
    %808 = vmatpush.bf16.msra.mxu0 %v572
    %809 = vmatpush.bf16.msra.mxu0 %v571
    %810 = vmatpush.bf16.msra.mxu0 %v570
    %811 = vmatpush.bf16.msra.mxu0 %v569
    %812 = vmatmul.bf16.gmra.mxu0 %v689
    %v813 = vpop.f32.mrf.mxu0
    %v814 = vadd.f32 %v741, %v813
    %v815 = vpop.f32.mrf.mxu0
    %v816 = vadd.f32 %v743, %v815
    %817 = vmatmul.bf16.gmra.mxu0 %v692
    %v818 = vpop.f32.mrf.mxu0
    %v819 = vadd.f32 %v746, %v818
    %v820 = vpop.f32.mrf.mxu0
    %v821 = vadd.f32 %v748, %v820
    %822 = vmatmul.bf16.gmra.mxu0 %v695
    %v823 = vpop.f32.mrf.mxu0
    %v824 = vadd.f32 %v751, %v823
    %v825 = vpop.f32.mrf.mxu0
    %v826 = vadd.f32 %v753, %v825
    %827 = vmatmul.bf16.gmra.mxu0 %v698
    %v828 = vpop.f32.mrf.mxu0
    %v829 = vadd.f32 %v756, %v828
    %v830 = vpop.f32.mrf.mxu0
    %v831 = vadd.f32 %v758, %v830
    %832 = vmatmul.bf16.gmra.mxu0 %v701
    %v833 = vpop.f32.mrf.mxu0
    %v834 = vadd.f32 %v761, %v833
    %v835 = vpop.f32.mrf.mxu0
    %v836 = vadd.f32 %v763, %v835
    %837 = vmatmul.bf16.gmra.mxu0 %v704
    %v838 = vpop.f32.mrf.mxu0
    %v839 = vadd.f32 %v766, %v838
    %v840 = vpop.f32.mrf.mxu0
    %v841 = vadd.f32 %v768, %v840
    %842 = vmatmul.bf16.gmra.mxu0 %v707
    %v843 = vpop.f32.mrf.mxu0
    %v844 = vadd.f32 %v771, %v843
    %v845 = vpop.f32.mrf.mxu0
    %v846 = vadd.f32 %v773, %v845
    %847 = vmatmul.bf16.gmra.mxu0 %v710
    %v848 = vpop.f32.mrf.mxu0
    %v849 = vadd.f32 %v776, %v848
    %v850 = vpop.f32.mrf.mxu0
    %v851 = vadd.f32 %v778, %v850
    %852 = vmatmul.bf16.gmra.mxu0 %v713
    %v853 = vpop.f32.mrf.mxu0
    %v854 = vadd.f32 %v781, %v853
    %v855 = vpop.f32.mrf.mxu0
    %v856 = vadd.f32 %v783, %v855
    %857 = vmatmul.bf16.gmra.mxu0 %v716
    %v858 = vpop.f32.mrf.mxu0
    %v859 = vadd.f32 %v786, %v858
    %v860 = vpop.f32.mrf.mxu0
    %v861 = vadd.f32 %v788, %v860
    %862 = vmatmul.bf16.gmra.mxu0 %v719
    %v863 = vpop.f32.mrf.mxu0
    %v864 = vadd.f32 %v791, %v863
    %v865 = vpop.f32.mrf.mxu0
    %v866 = vadd.f32 %v793, %v865
    %867 = vmatmul.bf16.gmra.mxu0 %v722
    %v868 = vpop.f32.mrf.mxu0
    %v869 = vadd.f32 %v796, %v868
    %v870 = vpop.f32.mrf.mxu0
    %v871 = vadd.f32 %v798, %v870
    %872 = vmatmul.bf16.gmra.mxu0 %v725
    %v873 = vpop.f32.mrf.mxu0
    %v874 = vadd.f32 %v801, %v873
    %v875 = vpop.f32.mrf.mxu0
    %876 = vdwg.mxu0
    %v877 = vmul.f32 %v245, %v814
    %v878 = vmul.f32 %v255, %v816
    %v879 = vmul.f32 %v265, %v819
    %v880 = vmul.f32 %v275, %v821
    %v881 = vmul.f32 %v285, %v824
    %v882 = vmul.f32 %v295, %v826
    %v883 = vmul.f32 %v305, %v829
    %v884 = vmul.f32 %v315, %v831
    %v885 = vmul.f32 %v325, %v834
    %v886 = vmul.f32 %v335, %v836
    %v887 = vmul.f32 %v345, %v839
    %v888 = vmul.f32 %v355, %v841
    %v889 = vmul.f32 %v365, %v844
    %v890 = vmul.f32 %v375, %v846
    %v891 = vmul.f32 %v385, %v849
    %v892 = vmul.f32 %v395, %v851
    %v893 = vmul.f32 %v405, %v854
    %v894 = vmul.f32 %v415, %v856
    %v895 = vmul.f32 %v425, %v859
    %v896 = vmul.f32 %v435, %v861
    %v897 = vmul.f32 %v445, %v864
    %v898 = vmul.f32 %v455, %v866
    %v899 = vmul.f32 %v465, %v869
    %v900 = vmul.f32 %v475, %v871
    %v901 = vmul.f32 %v485, %v874
    %v902 = vmax.f32 %v877, 0.0
    %v903 = vmax.f32 %v878, 0.0
    %v904 = vmax.f32 %v879, 0.0
    %v905 = vmax.f32 %v880, 0.0
    %v906 = vmax.f32 %v881, 0.0
    %v907 = vmax.f32 %v882, 0.0
    %v908 = vmax.f32 %v883, 0.0
    %v909 = vmax.f32 %v884, 0.0
    %v910 = vmax.f32 %v885, 0.0
    %v911 = vmax.f32 %v886, 0.0
    %v912 = vmax.f32 %v887, 0.0
    %v913 = vmax.f32 %v888, 0.0
    %v914 = vmax.f32 %v889, 0.0
    %v915 = vmax.f32 %v890, 0.0
    %v916 = vmax.f32 %v891, 0.0
    %v917 = vmax.f32 %v892, 0.0
    %v918 = vmax.f32 %v893, 0.0
    %v919 = vmax.f32 %v894, 0.0
    %v920 = vmax.f32 %v895, 0.0
    %v921 = vmax.f32 %v896, 0.0
    %v922 = vmax.f32 %v897, 0.0
    %v923 = vmax.f32 %v898, 0.0
    %v924 = vmax.f32 %v899, 0.0
    %v925 = vmax.f32 %v900, 0.0
    %v926 = vmax.f32 %v901, 0.0
    %v927 = vld [vmem:[%s2] sm:$0xf]
    %v928 = vld [vmem:[%s2 + $0x4] sm:$0xf]
    %v929 = vld [vmem:[%s2 + $0x8] sm:$0xf]
    %v930 = vld [vmem:[%s2 + $0xc] sm:$0xf]
    %v931 = vld [vmem:[%s2 + $0x10] sm:$0xf]
    %v932 = vld [vmem:[%s2 + $0x14] sm:$0xf]
    %v933 = vld [vmem:[%s2 + $0x18] sm:$0xf]
    %v934 = vld [vmem:[%s2 + $0x1c] sm:$0xf]
    %v935 = vld [vmem:[%s2 + $0x20] sm:$0xf]
    %v936 = vld [vmem:[%s2 + $0x24] sm:$0xf]
    %v937 = vld [vmem:[%s2 + $0x28] sm:$0xf]
    %v938 = vld [vmem:[%s2 + $0x2c] sm:$0xf]
    %v939 = vld [vmem:[%s2 + $0x30] sm:$0x3]
    %v940 = vpack.c.bf16 %v903, %v902
    %v941 = vpack.c.bf16 %v905, %v904
    %v942 = vpack.c.bf16 %v907, %v906
    %v943 = vpack.c.bf16 %v909, %v908
    %v944 = vpack.c.bf16 %v911, %v910
    %v945 = vpack.c.bf16 %v913, %v912
    %v946 = vpack.c.bf16 %v915, %v914
    %v947 = vpack.c.bf16 %v917, %v916
    %v948 = vpack.c.bf16 %v919, %v918
    %v949 = vpack.c.bf16 %v921, %v920
    %v950 = vpack.c.bf16 %v923, %v922
    %v951 = vpack.c.bf16 %v925, %v924
    %v952 = vpack.c.bf16 %v926, %v926
    %v966 = vunpack.c.l.b16 %v927
    %v967 = vunpack.c.l.b16 %v928
    %v968 = vunpack.c.l.b16 %v929
    %v969 = vunpack.c.l.b16 %v930
    %v970 = vunpack.c.l.b16 %v931
    %v971 = vunpack.c.l.b16 %v932
    %v972 = vunpack.c.l.b16 %v933
    %v973 = vunpack.c.l.b16 %v934
    %v974 = vunpack.c.l.b16 %v935
    %v975 = vunpack.c.l.b16 %v936
    %v976 = vunpack.c.l.b16 %v937
    %v977 = vunpack.c.l.b16 %v938
    %v978 = vunpack.c.l.b16 %v939
    %v979 = vpack.c.b16 %v967, %v966
    %v980 = vpack.c.b16 %v969, %v968
    %v981 = vpack.c.b16 %v971, %v970
    %v982 = vpack.c.b16 %v973, %v972
    %v983 = vpack.c.b16 %v975, %v974
    %v984 = vpack.c.b16 %v977, %v976
    %v985 = vpack.c.b16 %v978, %v978
    %vm992 = vcmask 818176
    %v994 = vsel %vm992, %v940, 0
    %v997 = vsel %vm992, %v941, 0
    %v1000 = vsel %vm992, %v942, 0
    %v1003 = vsel %vm992, %v943, 0
    %v1006 = vsel %vm992, %v944, 0
    %v1009 = vsel %vm992, %v945, 0
    %v1012 = vsel %vm992, %v946, 0
    %v1015 = vsel %vm992, %v947, 0
    %v1018 = vsel %vm992, %v948, 0
    %v1021 = vsel %vm992, %v949, 0
    %v1024 = vsel %vm992, %v950, 0
    %v1027 = vsel %vm992, %v951, 0
    %v1030 = vsel %vm992, %v952, 0
    %vm1032 = vcmask 1041408
    %v1034 = vsel %vm1032, %v985, 0
    %1036 = vmatpush.bf16.msra.mxu0 0
    %1037 = vmatpush.bf16.msra.mxu0 %v1034
    %1038 = vmatpush.bf16.msra.mxu0 %v984
    %1039 = vmatpush.bf16.msra.mxu0 %v983
    %1040 = vmatpush.bf16.msra.mxu0 %v982
    %1041 = vmatpush.bf16.msra.mxu0 %v981
    %1042 = vmatpush.bf16.msra.mxu0 %v980
    %1043 = vmatpush.bf16.msra.mxu0 %v979
    %1044 = vmatmul.bf16.gmra.mxu0 %v994
    %v1045 = vpop.f32.mrf.mxu0
    %v1046 = vadd.f32 0.0, %v1045
    %v1047 = vpop.f32.mrf.mxu0
    %v1048 = vadd.f32 0.0, %v1047
    %1049 = vmatmul.bf16.gmra.mxu0 %v997
    %v1050 = vpop.f32.mrf.mxu0
    %v1051 = vadd.f32 0.0, %v1050
    %v1052 = vpop.f32.mrf.mxu0
    %v1053 = vadd.f32 0.0, %v1052
    %1054 = vmatmul.bf16.gmra.mxu0 %v1000
    %v1055 = vpop.f32.mrf.mxu0
    %v1056 = vadd.f32 0.0, %v1055
    %v1057 = vpop.f32.mrf.mxu0
    %v1058 = vadd.f32 0.0, %v1057
    %1059 = vmatmul.bf16.gmra.mxu0 %v1003
    %v1060 = vpop.f32.mrf.mxu0
    %v1061 = vadd.f32 0.0, %v1060
    %v1062 = vpop.f32.mrf.mxu0
    %v1063 = vadd.f32 0.0, %v1062
    %1064 = vmatmul.bf16.gmra.mxu0 %v1006
    %v1065 = vpop.f32.mrf.mxu0
    %v1066 = vadd.f32 0.0, %v1065
    %v1067 = vpop.f32.mrf.mxu0
    %v1068 = vadd.f32 0.0, %v1067
    %1069 = vmatmul.bf16.gmra.mxu0 %v1009
    %v1070 = vpop.f32.mrf.mxu0
    %v1071 = vadd.f32 0.0, %v1070
    %v1072 = vpop.f32.mrf.mxu0
    %v1073 = vadd.f32 0.0, %v1072
    %1074 = vmatmul.bf16.gmra.mxu0 %v1012
    %v1075 = vpop.f32.mrf.mxu0
    %v1076 = vadd.f32 0.0, %v1075
    %v1077 = vpop.f32.mrf.mxu0
    %v1078 = vadd.f32 0.0, %v1077
    %1079 = vmatmul.bf16.gmra.mxu0 %v1015
    %v1080 = vpop.f32.mrf.mxu0
    %v1081 = vadd.f32 0.0, %v1080
    %v1082 = vpop.f32.mrf.mxu0
    %v1083 = vadd.f32 0.0, %v1082
    %1084 = vmatmul.bf16.gmra.mxu0 %v1018
    %v1085 = vpop.f32.mrf.mxu0
    %v1086 = vadd.f32 0.0, %v1085
    %v1087 = vpop.f32.mrf.mxu0
    %v1088 = vadd.f32 0.0, %v1087
    %1089 = vmatmul.bf16.gmra.mxu0 %v1021
    %v1090 = vpop.f32.mrf.mxu0
    %v1091 = vadd.f32 0.0, %v1090
    %v1092 = vpop.f32.mrf.mxu0
    %v1093 = vadd.f32 0.0, %v1092
    %1094 = vmatmul.bf16.gmra.mxu0 %v1024
    %v1095 = vpop.f32.mrf.mxu0
    %v1096 = vadd.f32 0.0, %v1095
    %v1097 = vpop.f32.mrf.mxu0
    %v1098 = vadd.f32 0.0, %v1097
    %1099 = vmatmul.bf16.gmra.mxu0 %v1027
    %v1100 = vpop.f32.mrf.mxu0
    %v1101 = vadd.f32 0.0, %v1100
    %v1102 = vpop.f32.mrf.mxu0
    %v1103 = vadd.f32 0.0, %v1102
    %1104 = vmatmul.bf16.gmra.mxu0 %v1030
    %v1105 = vpop.f32.mrf.mxu0
    %v1106 = vadd.f32 0.0, %v1105
    %v1107 = vpop.f32.mrf.mxu0
    %1108 = vdwg.mxu0
    %v1109 = vmul.f32 %v245, %v1046
    %v1110 = vmul.f32 %v255, %v1048
    %v1111 = vmul.f32 %v265, %v1051
    %v1112 = vmul.f32 %v275, %v1053
    %v1113 = vmul.f32 %v285, %v1056
    %v1114 = vmul.f32 %v295, %v1058
    %v1115 = vmul.f32 %v305, %v1061
    %v1116 = vmul.f32 %v315, %v1063
    %v1117 = vmul.f32 %v325, %v1066
    %v1118 = vmul.f32 %v335, %v1068
    %v1119 = vmul.f32 %v345, %v1071
    %v1120 = vmul.f32 %v355, %v1073
    %v1121 = vmul.f32 %v365, %v1076
    %v1122 = vmul.f32 %v375, %v1078
    %v1123 = vmul.f32 %v385, %v1081
    %v1124 = vmul.f32 %v395, %v1083
    %v1125 = vmul.f32 %v405, %v1086
    %v1126 = vmul.f32 %v415, %v1088
    %v1127 = vmul.f32 %v425, %v1091
    %v1128 = vmul.f32 %v435, %v1093
    %v1129 = vmul.f32 %v445, %v1096
    %v1130 = vmul.f32 %v455, %v1098
    %v1131 = vmul.f32 %v465, %v1101
    %v1132 = vmul.f32 %v475, %v1103
    %v1133 = vmul.f32 %v485, %v1106
    %v1134 = vpack.c.bf16 %v1110, %v1109
    %v1135 = vpack.c.bf16 %v1112, %v1111
    %v1136 = vpack.c.bf16 %v1114, %v1113
    %v1137 = vpack.c.bf16 %v1116, %v1115
    %v1138 = vpack.c.bf16 %v1118, %v1117
    %v1139 = vpack.c.bf16 %v1120, %v1119
    %v1140 = vpack.c.bf16 %v1122, %v1121
    %v1141 = vpack.c.bf16 %v1124, %v1123
    %v1142 = vpack.c.bf16 %v1126, %v1125
    %v1143 = vpack.c.bf16 %v1128, %v1127
    %v1144 = vpack.c.bf16 %v1130, %v1129
    %v1145 = vpack.c.bf16 %v1132, %v1131
    %v1146 = vpack.c.bf16 %v1133, %v1133
    %v1148 = vsel %vm727, %v1146, 0
    %1150 = vmatpush.bf16.msra.mxu0 %v1141
    %1151 = vmatpush.bf16.msra.mxu0 %v1140
    %1152 = vmatpush.bf16.msra.mxu0 %v1139
    %1153 = vmatpush.bf16.msra.mxu0 %v1138
    %1154 = vmatpush.bf16.msra.mxu0 %v1137
    %1155 = vmatpush.bf16.msra.mxu0 %v1136
    %1156 = vmatpush.bf16.msra.mxu0 %v1135
    %1157 = vmatpush.bf16.msra.mxu0 %v1134
    %1158 = vmatmul.bf16.gmra.mxu0 %v649
    %v1159 = vpop.f32.mrf.mxu0
    %v1160 = vadd.f32 %v1109, %v1159
    %v1161 = vpop.f32.mrf.mxu0
    %v1162 = vadd.f32 %v1110, %v1161
    %1163 = vmatmul.bf16.gmra.mxu0 %v651
    %v1164 = vpop.f32.mrf.mxu0
    %v1165 = vadd.f32 %v1111, %v1164
    %v1166 = vpop.f32.mrf.mxu0
    %v1167 = vadd.f32 %v1112, %v1166
    %1168 = vmatmul.bf16.gmra.mxu0 %v653
    %v1169 = vpop.f32.mrf.mxu0
    %v1170 = vadd.f32 %v1113, %v1169
    %v1171 = vpop.f32.mrf.mxu0
    %v1172 = vadd.f32 %v1114, %v1171
    %1173 = vmatmul.bf16.gmra.mxu0 %v655
    %v1174 = vpop.f32.mrf.mxu0
    %v1175 = vadd.f32 %v1115, %v1174
    %v1176 = vpop.f32.mrf.mxu0
    %v1177 = vadd.f32 %v1116, %v1176
    %1178 = vmatmul.bf16.gmra.mxu0 %v657
    %v1179 = vpop.f32.mrf.mxu0
    %v1180 = vadd.f32 %v1117, %v1179
    %v1181 = vpop.f32.mrf.mxu0
    %v1182 = vadd.f32 %v1118, %v1181
    %1183 = vmatmul.bf16.gmra.mxu0 %v659
    %v1184 = vpop.f32.mrf.mxu0
    %v1185 = vadd.f32 %v1119, %v1184
    %v1186 = vpop.f32.mrf.mxu0
    %v1187 = vadd.f32 %v1120, %v1186
    %1188 = vmatmul.bf16.gmra.mxu0 %v661
    %v1189 = vpop.f32.mrf.mxu0
    %v1190 = vadd.f32 %v1121, %v1189
    %v1191 = vpop.f32.mrf.mxu0
    %v1192 = vadd.f32 %v1122, %v1191
    %1193 = vmatmul.bf16.gmra.mxu0 %v663
    %v1194 = vpop.f32.mrf.mxu0
    %v1195 = vadd.f32 %v1123, %v1194
    %v1196 = vpop.f32.mrf.mxu0
    %v1197 = vadd.f32 %v1124, %v1196
    %1198 = vmatmul.bf16.gmra.mxu0 %v665
    %v1199 = vpop.f32.mrf.mxu0
    %v1200 = vadd.f32 %v1125, %v1199
    %v1201 = vpop.f32.mrf.mxu0
    %v1202 = vadd.f32 %v1126, %v1201
    %1203 = vmatmul.bf16.gmra.mxu0 %v667
    %v1204 = vpop.f32.mrf.mxu0
    %v1205 = vadd.f32 %v1127, %v1204
    %v1206 = vpop.f32.mrf.mxu0
    %v1207 = vadd.f32 %v1128, %v1206
    %1208 = vmatmul.bf16.gmra.mxu0 %v669
    %v1209 = vpop.f32.mrf.mxu0
    %v1210 = vadd.f32 %v1129, %v1209
    %v1211 = vpop.f32.mrf.mxu0
    %v1212 = vadd.f32 %v1130, %v1211
    %1213 = vmatmul.bf16.gmra.mxu0 %v671
    %v1214 = vpop.f32.mrf.mxu0
    %v1215 = vadd.f32 %v1131, %v1214
    %v1216 = vpop.f32.mrf.mxu0
    %v1217 = vadd.f32 %v1132, %v1216
    %1218 = vmatmul.bf16.gmra.mxu0 %v673
    %v1219 = vpop.f32.mrf.mxu0
    %v1220 = vadd.f32 %v1133, %v1219
    %v1221 = vpop.f32.mrf.mxu0
    %1222 = vdwg.mxu0
    %1223 = vmatpush.bf16.msra.mxu0 0
    %1224 = vmatpush.bf16.msra.mxu0 0
    %1225 = vmatpush.bf16.msra.mxu0 0
    %1226 = vmatpush.bf16.msra.mxu0 %v1148
    %1227 = vmatpush.bf16.msra.mxu0 %v1145
    %1228 = vmatpush.bf16.msra.mxu0 %v1144
    %1229 = vmatpush.bf16.msra.mxu0 %v1143
    %1230 = vmatpush.bf16.msra.mxu0 %v1142
    %1231 = vmatmul.bf16.gmra.mxu0 %v689
    %v1232 = vpop.f32.mrf.mxu0
    %v1233 = vadd.f32 %v1160, %v1232
    %v1234 = vpop.f32.mrf.mxu0
    %v1235 = vadd.f32 %v1162, %v1234
    %1236 = vmatmul.bf16.gmra.mxu0 %v692
    %v1237 = vpop.f32.mrf.mxu0
    %v1238 = vadd.f32 %v1165, %v1237
    %v1239 = vpop.f32.mrf.mxu0
    %v1240 = vadd.f32 %v1167, %v1239
    %1241 = vmatmul.bf16.gmra.mxu0 %v695
    %v1242 = vpop.f32.mrf.mxu0
    %v1243 = vadd.f32 %v1170, %v1242
    %v1244 = vpop.f32.mrf.mxu0
    %v1245 = vadd.f32 %v1172, %v1244
    %1246 = vmatmul.bf16.gmra.mxu0 %v698
    %v1247 = vpop.f32.mrf.mxu0
    %v1248 = vadd.f32 %v1175, %v1247
    %v1249 = vpop.f32.mrf.mxu0
    %v1250 = vadd.f32 %v1177, %v1249
    %1251 = vmatmul.bf16.gmra.mxu0 %v701
    %v1252 = vpop.f32.mrf.mxu0
    %v1253 = vadd.f32 %v1180, %v1252
    %v1254 = vpop.f32.mrf.mxu0
    %v1255 = vadd.f32 %v1182, %v1254
    %1256 = vmatmul.bf16.gmra.mxu0 %v704
    %v1257 = vpop.f32.mrf.mxu0
    %v1258 = vadd.f32 %v1185, %v1257
    %v1259 = vpop.f32.mrf.mxu0
    %v1260 = vadd.f32 %v1187, %v1259
    %1261 = vmatmul.bf16.gmra.mxu0 %v707
    %v1262 = vpop.f32.mrf.mxu0
    %v1263 = vadd.f32 %v1190, %v1262
    %v1264 = vpop.f32.mrf.mxu0
    %v1265 = vadd.f32 %v1192, %v1264
    %1266 = vmatmul.bf16.gmra.mxu0 %v710
    %v1267 = vpop.f32.mrf.mxu0
    %v1268 = vadd.f32 %v1195, %v1267
    %v1269 = vpop.f32.mrf.mxu0
    %v1270 = vadd.f32 %v1197, %v1269
    %1271 = vmatmul.bf16.gmra.mxu0 %v713
    %v1272 = vpop.f32.mrf.mxu0
    %v1273 = vadd.f32 %v1200, %v1272
    %v1274 = vpop.f32.mrf.mxu0
    %v1275 = vadd.f32 %v1202, %v1274
    %1276 = vmatmul.bf16.gmra.mxu0 %v716
    %v1277 = vpop.f32.mrf.mxu0
    %v1278 = vadd.f32 %v1205, %v1277
    %v1279 = vpop.f32.mrf.mxu0
    %v1280 = vadd.f32 %v1207, %v1279
    %1281 = vmatmul.bf16.gmra.mxu0 %v719
    %v1282 = vpop.f32.mrf.mxu0
    %v1283 = vadd.f32 %v1210, %v1282
    %v1284 = vpop.f32.mrf.mxu0
    %v1285 = vadd.f32 %v1212, %v1284
    %1286 = vmatmul.bf16.gmra.mxu0 %v722
    %v1287 = vpop.f32.mrf.mxu0
    %v1288 = vadd.f32 %v1215, %v1287
    %v1289 = vpop.f32.mrf.mxu0
    %v1290 = vadd.f32 %v1217, %v1289
    %1291 = vmatmul.bf16.gmra.mxu0 %v725
    %v1292 = vpop.f32.mrf.mxu0
    %v1293 = vadd.f32 %v1220, %v1292
    %v1294 = vpop.f32.mrf.mxu0
    %1295 = vdwg.mxu0
    %v1296 = vmul.f32 %v245, %v1233
    %v1297 = vmul.f32 %v255, %v1235
    %v1298 = vmul.f32 %v265, %v1238
    %v1299 = vmul.f32 %v275, %v1240
    %v1300 = vmul.f32 %v285, %v1243
    %v1301 = vmul.f32 %v295, %v1245
    %v1302 = vmul.f32 %v305, %v1248
    %v1303 = vmul.f32 %v315, %v1250
    %v1304 = vmul.f32 %v325, %v1253
    %v1305 = vmul.f32 %v335, %v1255
    %v1306 = vmul.f32 %v345, %v1258
    %v1307 = vmul.f32 %v355, %v1260
    %v1308 = vmul.f32 %v365, %v1263
    %v1309 = vmul.f32 %v375, %v1265
    %v1310 = vmul.f32 %v385, %v1268
    %v1311 = vmul.f32 %v395, %v1270
    %v1312 = vmul.f32 %v405, %v1273
    %v1313 = vmul.f32 %v415, %v1275
    %v1314 = vmul.f32 %v425, %v1278
    %v1315 = vmul.f32 %v435, %v1280
    %v1316 = vmul.f32 %v445, %v1283
    %v1317 = vmul.f32 %v455, %v1285
    %v1318 = vmul.f32 %v465, %v1288
    %v1319 = vmul.f32 %v475, %v1290
    %v1320 = vmul.f32 %v485, %v1293
    %v1321 = vmax.f32 %v1296, 0.0
    %v1322 = vmax.f32 %v1297, 0.0
    %v1323 = vmax.f32 %v1298, 0.0
    %v1324 = vmax.f32 %v1299, 0.0
    %v1325 = vmax.f32 %v1300, 0.0
    %v1326 = vmax.f32 %v1301, 0.0
    %v1327 = vmax.f32 %v1302, 0.0
    %v1328 = vmax.f32 %v1303, 0.0
    %v1329 = vmax.f32 %v1304, 0.0
    %v1330 = vmax.f32 %v1305, 0.0
    %v1331 = vmax.f32 %v1306, 0.0
    %v1332 = vmax.f32 %v1307, 0.0
    %v1333 = vmax.f32 %v1308, 0.0
    %v1334 = vmax.f32 %v1309, 0.0
    %v1335 = vmax.f32 %v1310, 0.0
    %v1336 = vmax.f32 %v1311, 0.0
    %v1337 = vmax.f32 %v1312, 0.0
    %v1338 = vmax.f32 %v1313, 0.0
    %v1339 = vmax.f32 %v1314, 0.0
    %v1340 = vmax.f32 %v1315, 0.0
    %v1341 = vmax.f32 %v1316, 0.0
    %v1342 = vmax.f32 %v1317, 0.0
    %v1343 = vmax.f32 %v1318, 0.0
    %v1344 = vmax.f32 %v1319, 0.0
    %v1345 = vmax.f32 %v1320, 0.0
    %v1346 = vld [vmem:[#allocation2 + $0x18] sm:$0x22]
    %v1347 = vunpack.c.l.bf16 %v1346
    %v1348 = vunpack.c.h.bf16 %v1346
    %v1349 = vlaneseq
    %v1350 = vand.u32 %v1349, 127
    %v1351 = vadd.s32 %v1350, 128
    %vm1352 = vcmp.eq.s32.totalorder %v1350, 27
    %vm1353 = vcmp.eq.s32.totalorder %v1351, 27
    %v1354 = vsel %vm1352, 1, 0
    %v1355 = vsel %vm1353, 1, 0
    %v1356 = vcvt.s32.f32 %v1354
    %v1357 = vcvt.s32.f32 %v1355
    %v1358 = vadd.f32 %v1347, %v1356
    %v1359 = vadd.f32 %v1348, %v1357
    %v1362 = vrot.slane %v1358, 3
    %v1363 = vrot.slane %v1359, 3
    %vm1366 = vcmask 1040384
    %v1367 = vsel %vm1366, %v1362, 0.0
    %vm1368 = vcmask 581632
    %v1369 = vsel %vm1368, %v1363, 0.0
    %v1370 = vadd.f32 %v1367, %v1369
    %1371 = vadd.xlane.f32.xlu0 %v1370
    %v1372 = vpop.xlane.xlu0 %1371
    %v1373 = vrot.slane %v1372, 4
    %v1374 = vadd.f32 %v1372, %v1373
    %v1375 = vrot.slane %v1374, 2
    %v1376 = vadd.f32 %v1374, %v1375
    %v1377 = vrot.slane %v1376, 1
    %v1378 = vadd.f32 %v1376, %v1377
    %s1379 = vtos %v1378
    %v1380 = vstv %s1379
    %v1381 = vrsqrt.pop %v1380
    %v1382 = vmul.f32 %v1381, %v1380
    %v1383 = vmul.f32 %v1382, %v1381
    %v1384 = vmul.f32 0.5, %v1383
    %v1385 = vsub.f32 1.5, %v1384
    %v1386 = vmul.f32 %v1381, %v1385
    %vm1387 = vweird.f32 %v1380
    %vm1388 = vweird.f32 %v1381
    %vm1389 = vmor %vm1387, %vm1388
    %v1390 = vsel %vm1389, %v1381, %v1386
    %s1391 = vtos %v1390
    %v1392 = vmul.f32 %v245, %v1321
    %v1393 = vmul.f32 %v255, %v1322
    %v1394 = vmul.f32 %v265, %v1323
    %v1395 = vmul.f32 %v275, %v1324
    %v1396 = vmul.f32 %v285, %v1325
    %v1397 = vmul.f32 %v295, %v1326
    %v1398 = vmul.f32 %v305, %v1327
    %v1399 = vmul.f32 %v315, %v1328
    %v1400 = vmul.f32 %v325, %v1329
    %v1401 = vmul.f32 %v335, %v1330
    %v1402 = vmul.f32 %v345, %v1331
    %v1403 = vmul.f32 %v355, %v1332
    %v1404 = vmul.f32 %v365, %v1333
    %v1405 = vmul.f32 %v375, %v1334
    %v1406 = vmul.f32 %v385, %v1335
    %v1407 = vmul.f32 %v395, %v1336
    %v1408 = vmul.f32 %v405, %v1337
    %v1409 = vmul.f32 %v415, %v1338
    %v1410 = vmul.f32 %v425, %v1339
    %v1411 = vmul.f32 %v435, %v1340
    %v1412 = vmul.f32 %v445, %v1341
    %v1413 = vmul.f32 %v455, %v1342
    %v1414 = vmul.f32 %v465, %v1343
    %v1415 = vmul.f32 %v475, %v1344
    %v1416 = vmul.f32 %v485, %v1345
    %v1417 = vpack.c.bf16 %v1358, %v1358
    %v1418 = vpack.c.bf16 %v1359, %v1359
    %v1419 = vpack.c.bf16 %v1393, %v1392
    %v1420 = vpack.c.bf16 %v1395, %v1394
    %v1421 = vpack.c.bf16 %v1397, %v1396
    %v1422 = vpack.c.bf16 %v1399, %v1398
    %v1423 = vpack.c.bf16 %v1401, %v1400
    %v1424 = vpack.c.bf16 %v1403, %v1402
    %v1425 = vpack.c.bf16 %v1405, %v1404
    %v1426 = vpack.c.bf16 %v1407, %v1406
    %v1427 = vpack.c.bf16 %v1409, %v1408
    %v1428 = vpack.c.bf16 %v1411, %v1410
    %v1429 = vpack.c.bf16 %v1413, %v1412
    %v1430 = vpack.c.bf16 %v1415, %v1414
    %v1431 = vpack.c.bf16 %v1416, %v1416
    %v1433 = vshrl.u32 %v1417, 16
    %v1435 = vrot.slane %v1433, 1
    %v1437 = vshrl.u32 %v1418, 16
    %v1439 = vrot.slane %v1437, 1
    %v1442 = vsel %vm110, %v1439, 0
    %v1445 = vsel %vm727, %v1431, 0
    %1447 = vmatpush.bf16.msra.mxu0 %v1426
    %1448 = vmatpush.bf16.msra.mxu0 %v1425
    %1449 = vmatpush.bf16.msra.mxu0 %v1424
    %1450 = vmatpush.bf16.msra.mxu0 %v1423
    %1451 = vmatpush.bf16.msra.mxu0 %v1422
    %1452 = vmatpush.bf16.msra.mxu0 %v1421
    %1453 = vmatpush.bf16.msra.mxu0 %v1420
    %1454 = vmatpush.bf16.msra.mxu0 %v1419
    %1455 = vmatmul.bf16.gmra.mxu0 %v1435
    %v1456 = vpop.f32.mrf.mxu0
    %v1457 = vadd.f32 0.0, %v1456
    %v1458 = vpop.f32.mrf.mxu0
    %1459 = vdwg.mxu0
    %1460 = vmatpush.bf16.msra.mxu0 0
    %1461 = vmatpush.bf16.msra.mxu0 0
    %1462 = vmatpush.bf16.msra.mxu0 0
    %1463 = vmatpush.bf16.msra.mxu0 %v1445
    %1464 = vmatpush.bf16.msra.mxu0 %v1430
    %1465 = vmatpush.bf16.msra.mxu0 %v1429
    %1466 = vmatpush.bf16.msra.mxu0 %v1428
    %1467 = vmatpush.bf16.msra.mxu0 %v1427
    %1468 = vmatmul.bf16.gmra.mxu0 %v1442
    %v1469 = vpop.f32.mrf.mxu0
    %v1470 = vadd.f32 %v1457, %v1469
    %v1471 = vpop.f32.mrf.mxu0
    %1472 = vdwg.mxu0
    %v1473 = vld [vmem:[%s3] sm:$0xf]
    %v1474 = vld [vmem:[%s3 + $0x4] sm:$0xf]
    %v1475 = vld [vmem:[%s3 + $0x8] sm:$0xf]
    %v1476 = vld [vmem:[%s3 + $0xc] sm:$0xf]
    %v1477 = vld [vmem:[%s3 + $0x10] sm:$0xf]
    %v1478 = vld [vmem:[%s3 + $0x14] sm:$0xf]
    %v1479 = vld [vmem:[%s3 + $0x18] sm:$0x1]
    %v1480 = vpack.c.bf16 %v1470, %v1470
    %v1488 = vunpack.c.l.b16 %v1473
    %v1489 = vunpack.c.l.b16 %v1474
    %v1490 = vunpack.c.l.b16 %v1475
    %v1491 = vunpack.c.l.b16 %v1476
    %v1492 = vunpack.c.l.b16 %v1477
    %v1493 = vunpack.c.l.b16 %v1478
    %v1494 = vunpack.c.l.b16 %v1479
    %v1495 = vpack.c.b16 %v1489, %v1488
    %v1496 = vpack.c.b16 %v1491, %v1490
    %v1497 = vpack.c.b16 %v1493, %v1492
    %v1498 = vpack.c.b16 %v1494, %v1494
    %vm1502 = vcmask 408576
    %v1504 = vsel %vm1502, %v1480, 0
    %v1507 = vsel %vm1366, %v1498, 0
    %1509 = vmatpush.bf16.msra.mxu0 0
    %1510 = vmatpush.bf16.msra.mxu0 0
    %1511 = vmatpush.bf16.msra.mxu0 0
    %1512 = vmatpush.bf16.msra.mxu0 0
    %1513 = vmatpush.bf16.msra.mxu0 %v1507
    %1514 = vmatpush.bf16.msra.mxu0 %v1497
    %1515 = vmatpush.bf16.msra.mxu0 %v1496
    %1516 = vmatpush.bf16.msra.mxu0 %v1495
    %1517 = vmatmul.bf16.gmra.mxu0 %v1504
    %v1518 = vpop.f32.mrf.mxu0
    %v1519 = vadd.f32 0.0, %v1518
    %v1520 = vpop.f32.mrf.mxu0
    %1521 = vdwg.mxu0
    %v1522 = vstv %s1391
    %v1523 = vmul.f32 %v1522, %v1519
    %v1524 = vmax.f32 %v1523, 0.0
    %vm1525 = vcmask 155648
    %1526 = vst.msk [vmem:[#allocation5] sm:$0x1] %vm1525, %v1524
    // Predicated region
    $region22: #{tpu_custom_call.1} parent=1 // pred_check
      _
    $region23: #{tpu_custom_call.1} parent=1 // pred_check_branch
      %1528 = sbr.rel (0) target = $region25
    $region24: #{tpu_custom_call.1} parent=1 // pred_region
      %1530 = vsyncadd [#allocation4], 0
      %s1532 = sshll.u32 [#allocation5], 4
      %s1533 = int_to_ptr.vmem [resolvable:$true] %s1532
      %s1534 = sshll.u32 %s4, 4
      %s1535 = int_to_ptr.hbm [resolvable:$true] %s1534
      %1537 = dma.vmem_to_hbm [thread:$0]  %s1533, 16, %s1535, [#allocation4]
    $region25: #{tpu_custom_call.1} parent=1 // pred_fallthru
      _
    // Predicated region
    $region26: #{tpu_custom_call.1} parent=1 // pred_check
      _
    $region27: #{tpu_custom_call.1} parent=1 // pred_check_branch
      %1539 = sbr.rel (0) target = $region29
    $region28: #{tpu_custom_call.1} parent=1 // pred_region
      %1541 = dma.done [#allocation4], 16
    $region29: #{tpu_custom_call.1} parent=1 // pred_fallthru
      _
    %1542 = vsyncpa [#allocation3], 1
    %1543 = vsyncpa [#allocation4], 1

</llo_original>
